<compile_context>
chip_gen: v6e
topology: v6e:2x2x1
jax: 0.10.0
libtpu: 0.0.40
codegen_flags: <defaults>
</compile_context>

<pallas_src>
import jax
import jax.numpy as jnp
from jax.experimental import pallas as pl
from jax.experimental.pallas import tpu as pltpu

BF16 = jnp.bfloat16
F32 = jnp.float32


def _round_up(x, m):
    return ((x + m - 1) // m) * m


def _cdiv(a, b):
    return (a + b - 1) // b


def _chip_info():
    """Best-effort chip detection; falls back to conservative defaults."""
    try:
        kind = jax.devices()[0].device_kind.lower()
    except Exception:
        kind = ""
    try:
        vmem_cap = int(pltpu.get_tpu_info().vmem_capacity_bytes)
    except Exception:
        vmem_cap = 64 << 20          # v7x per-TC minimum -> always safe
    n_align = 256 if ("v6" in kind or "v7" in kind) else 128   # MXU width
    two_core = "v7" in kind                                    # 2 TCs/chip
    stream_bufs = 3 if "v5" in kind else 2                     # deeper pipe on v5e
    return dict(kind=kind, vmem_cap=vmem_cap, n_align=n_align,
                two_core=two_core, stream_bufs=stream_bufs)


# ---------------------------------------------------------------------------
# Kernel
# ---------------------------------------------------------------------------
def _projection_head_kernel(x_ref,
                            w_enc_ref, b_enc_ref,
                            w1_ref, b1_ref,
                            w2_ref, b2_ref,
                            w3_ref, b3_ref,
                            out_ref,
                            acc_ref):
    k = pl.program_id(1)

    @pl.when(k == 0)
    def _():
        # Fold the encoder bias into the accumulator init.
        acc_ref[...] = jnp.broadcast_to(b_enc_ref[...], acc_ref.shape)

    # encoder f: streamed K-reduction over flat_in, bf16 inputs, f32 MXU accum.
    acc_ref[...] += jnp.dot(x_ref[...], w_enc_ref[...],
                            preferred_element_type=jnp.float32)

    @pl.when(k == pl.num_programs(1) - 1)
    def _():
        feat = acc_ref[...]
        # g[0]: Linear(emb, emb)   (+ Dropout == identity in eval)
        h1 = jnp.dot(feat.astype(BF16), w1_ref[...],
                     preferred_element_type=jnp.float32) + b1_ref[...]
        # g[2]: Linear(emb, emb)   (+ Dropout == identity in eval)
        h2 = jnp.dot(h1.astype(BF16), w2_ref[...],
                     preferred_element_type=jnp.float32) + b2_ref[...]
        # g[4]: Linear(emb, latent) into a lane-dense (TM, LAT_P) block.
        out = jnp.dot(h2.astype(BF16), w3_ref[...],
                      preferred_element_type=jnp.float32) + b3_ref[...]
        out_ref[...] = out.astype(out_ref.dtype)


# ---------------------------------------------------------------------------
# Parameter prep (hoisted out of the per-call path)
# ---------------------------------------------------------------------------
def _pad_cast(a, rows, cols, dtype):
    out = jnp.zeros((rows, cols), dtype)
    return out.at[:a.shape[0], :a.shape[1]].set(a.astype(dtype))


def prepare_projection_params(params, flat_in, *, tm_cap=256, tk=2048):
    """Pad/cast weights once, pick tile sizes under a chip-aware VMEM budget."""
    info = _chip_info()
    n_align = info["n_align"]
    emb = params["w1"].shape[0]
    latent = params["w3"].shape[1]

    EMB_P = _round_up(emb, n_align)
    LAT_P = _round_up(latent, n_align)
    K_P = _round_up(flat_in, 128)

    # Reduction tiles: multiples of 128 that divide K_P (no extra K padding),
    # largest first.
    cands = [c for c in range(min(tk, K_P), 127, -128) if K_P % c == 0]

    sb = info["stream_bufs"]
    vmem_budget = max(info["vmem_cap"] - (8 << 20), 16 << 20)

    def vmem_est(TM, TK):
        return (sb * TM * TK * 2                           # x stream bufs (bf16)
                + sb * TK * EMB_P * 2                      # w_enc stream bufs (bf16)
                + (2 * EMB_P * EMB_P + EMB_P * LAT_P) * 2  # w1,w2,w3 single-buffered
                + (3 * EMB_P + LAT_P) * 4                  # biases single-buffered
                + 2 * TM * LAT_P * 4                       # out (f32, double-buffered)
                + TM * EMB_P * 4)                          # accumulator scratch

    TM_cap = max(16, _round_up(tm_cap, 16))
    TK = cands[-1]
    for c in cands:
        if vmem_est(TM_cap, c) <= vmem_budget:
            TK = c
            break
    while vmem_est(TM_cap, TK) > vmem_budget and TM_cap > 16:
        TM_cap = max(16, _round_up(TM_cap // 2, 16))

    prep = dict(
        w_enc=_pad_cast(params["w_enc"], K_P, EMB_P, BF16),
        b_enc=_pad_cast(params["b_enc"], 1, EMB_P, F32),
        w1=_pad_cast(params["w1"], EMB_P, EMB_P, BF16),
        b1=_pad_cast(params["b1"], 1, EMB_P, F32),
        w2=_pad_cast(params["w2"], EMB_P, EMB_P, BF16),
        b2=_pad_cast(params["b2"], 1, EMB_P, F32),
        w3=_pad_cast(params["w3"], EMB_P, LAT_P, BF16),
        b3=_pad_cast(params["b3"], 1, LAT_P, F32),
    )
    meta = dict(flat_in=flat_in, emb=emb, latent=latent,
                EMB_P=EMB_P, LAT_P=LAT_P, K_P=K_P, TK=TK,
                TM_cap=TM_cap, vmem_budget=vmem_budget, vmem_est=vmem_est,
                stream_bufs=sb, two_core=info["two_core"])
    return prep, meta


# ---------------------------------------------------------------------------
# Forward
# ---------------------------------------------------------------------------
def projection_head_forward(x_nchw, prep, meta):
    """x_nchw: (B, C, H, W) float32. Returns (B, latent_size) float32."""
    B = x_nchw.shape[0]
    flat_in = meta["flat_in"]
    x_flat = x_nchw.reshape(B, -1)          # row-major flatten == torch .view(B, -1)
    assert x_flat.shape[1] == flat_in

    EMB_P, LAT_P = meta["EMB_P"], meta["LAT_P"]
    K_P, TK = meta["K_P"], meta["TK"]

    # Batch tile: as few tiles as possible (w_enc is re-streamed per batch tile),
    # rounded to 16 for bf16 sublane packing; on v7x split into >=2 tiles so the
    # second TensorCore has work once the batch allows it.
    TM = min(meta["TM_cap"], _round_up(B, 16))
    if meta["two_core"] and B >= 32:
        TM = min(TM, _round_up(_cdiv(B, 2), 16))
    B_P = _round_up(B, TM)

    # Activation: plain bf16 cast when already tile-aligned, pad only if ragged.
    if B_P == B and K_P == flat_in:
        xp = x_flat.astype(BF16)
    else:
        xp = jnp.zeros((B_P, K_P), BF16).at[:B, :flat_in].set(x_flat.astype(BF16))

    grid = (B_P // TM, K_P // TK)           # (batch tiles "parallel", K reduction last)

    def build(use_pipeline_modes):
        stream_mode = None
        single_mode = None
        if use_pipeline_modes:
            single_mode = pl.Buffered(1)                      # const-index operands
            if meta["stream_bufs"] != 2:
                stream_mode = pl.Buffered(meta["stream_bufs"])  # deeper pipe (v5e)

        def spec(shape, imap, mode):
            if mode is None:
                return pl.BlockSpec(shape, imap)
            return pl.BlockSpec(shape, imap, pipeline_mode=mode)

        const = lambda i, k: (0, 0)
        in_specs = [
            spec((TM, TK),       lambda i, k: (i, k), stream_mode),   # x tile
            spec((TK, EMB_P),    lambda i, k: (k, 0), stream_mode),   # w_enc streamed
            spec((1, EMB_P),     const, single_mode),                 # b_enc
            spec((EMB_P, EMB_P), const, single_mode),                 # w1 (resident)
            spec((1, EMB_P),     const, single_mode),                 # b1
            spec((EMB_P, EMB_P), const, single_mode),                 # w2
            spec((1, EMB_P),     const, single_mode),                 # b2
            spec((EMB_P, LAT_P), const, single_mode),                 # w3
            spec((1, LAT_P),     const, single_mode),                 # b3
        ]
        out_spec = pl.BlockSpec((TM, LAT_P), lambda i, k: (i, 0))

        est = meta["vmem_est"](TM, TK)
        if not use_pipeline_modes:
            # fallback double-buffers the constants too
            est += (2 * EMB_P * EMB_P + EMB_P * LAT_P) * 2 + (3 * EMB_P + LAT_P) * 4
        vmem_limit = int(min(meta["vmem_budget"],
                             max(int(est * 1.5) + (4 << 20), 24 << 20)))

        flops = 2 * B_P * (K_P * EMB_P + 2 * EMB_P * EMB_P + EMB_P * LAT_P)
        bytes_accessed = (
            B_P * K_P * 2
            + grid[0] * K_P * EMB_P * 2
            + (2 * EMB_P * EMB_P + EMB_P * LAT_P) * 2
            + (3 * EMB_P + LAT_P) * 4
            + B_P * LAT_P * 4)

        return pl.pallas_call(
            _projection_head_kernel,
            out_shape=jax.ShapeDtypeStruct((B_P, LAT_P), F32),
            grid_spec=pltpu.PrefetchScalarGridSpec(
                num_scalar_prefetch=0,
                grid=grid,
                in_specs=in_specs,
                out_specs=out_spec,
                scratch_shapes=[pltpu.VMEM((TM, EMB_P), F32)],
            ),
            compiler_params=pltpu.CompilerParams(
                dimension_semantics=("parallel", "arbitrary"),
                vmem_limit_bytes=vmem_limit,
            ),
            cost_estimate=pl.CostEstimate(
                flops=int(flops), transcendentals=0,
                bytes_accessed=int(bytes_accessed)),
        )

    args = (xp, prep["w_enc"], prep["b_enc"], prep["w1"], prep["b1"],
            prep["w2"], prep["b2"], prep["w3"], prep["b3"])
    try:
        out = jax.block_until_ready(build(True)(*args))
    except Exception:
        # Portability fallback: default double-buffering on every operand.
        out = build(False)(*args)
    return out[:B, :meta["latent"]]


# ---------------------------------------------------------------------------
# Parameter init (PyTorch nn.Linear defaults) + self-test
# ---------------------------------------------------------------------------
def _linear_init(key, in_dim, out_dim, dtype=jnp.float32):
    # PyTorch nn.Linear default: U(-1/sqrt(in), 1/sqrt(in)) for weight and bias.
    kw, kb = jax.random.split(key)
    bound = 1.0 / jnp.sqrt(jnp.float32(in_dim))
    # stored transposed: (in_dim, out_dim) so kernel does x @ W
    w = jax.random.uniform(kw, (in_dim, out_dim), dtype, -bound, bound)
    b = jax.random.uniform(kb, (1, out_dim), dtype, -bound, bound)
    return w, b


def make_params(key, flat_in, emb_size, latent_size):
    k_enc, k1, k2, k3 = jax.random.split(key, 4)
    w_enc, b_enc = _linear_init(k_enc, flat_in, emb_size)
    w1, b1 = _linear_init(k1, emb_size, emb_size)
    w2, b2 = _linear_init(k2, emb_size, emb_size)
    w3, b3 = _linear_init(k3, emb_size, latent_size)
    return dict(w_enc=w_enc, b_enc=b_enc, w1=w1, b1=b1,
                w2=w2, b2=b2, w3=w3, b3=b3)


if __name__ == "__main__":
    key = jax.random.PRNGKey(0)
    k_x, k_p = jax.random.split(key)

    B, C, H, W = 2, 4, 16, 16          # NCHW input
    emb_size, latent_size = 32, 16
    flat_in = C * H * W

    x = jax.random.normal(k_x, (B, C, H, W), dtype=jnp.float32)
    params = make_params(k_p, flat_in, emb_size, latent_size)

    prep, meta = prepare_projection_params(params, flat_in)

    latent = projection_head_forward(x, prep, meta)
    latent = jax.block_until_ready(latent)
    assert latent.shape == (B, latent_size)

    # Reference (eval-mode forward) with the same bf16-weight / f32-accumulate math.
    def mm(a, w):
        return jnp.dot(a.astype(BF16), w.astype(BF16),
                       preferred_element_type=jnp.float32)

    x_flat = x.reshape(B, -1)
    feat = mm(x_flat, params["w_enc"]) + params["b_enc"]
    h1 = mm(feat, params["w1"]) + params["b1"]
    h2 = mm(h1, params["w2"]) + params["b2"]
    ref = mm(h2, params["w3"]) + params["b3"]

    assert jnp.allclose(latent, ref, atol=1e-2, rtol=1e-2), (
        float(jnp.max(jnp.abs(latent - ref))))

    print("KERNEL_OK")
</pallas_src>

<mosaic_0001>
module attributes {stable_mosaic.version = 11 : i64} {
  func.func @_projection_head_kernel(%arg0: i32, %arg1: i32, %arg2: memref<16x1024xbf16, #tpu.memory_space<vmem>>, %arg3: memref<1024x128xbf16, #tpu.memory_space<vmem>>, %arg4: memref<1x128xf32, #tpu.memory_space<vmem>>, %arg5: memref<128x128xbf16, #tpu.memory_space<vmem>>, %arg6: memref<1x128xf32, #tpu.memory_space<vmem>>, %arg7: memref<128x128xbf16, #tpu.memory_space<vmem>>, %arg8: memref<1x128xf32, #tpu.memory_space<vmem>>, %arg9: memref<128x128xbf16, #tpu.memory_space<vmem>>, %arg10: memref<1x128xf32, #tpu.memory_space<vmem>>, %arg11: memref<16x128xf32, #tpu.memory_space<vmem>>, %arg12: memref<16x128xf32, #tpu.memory_space<vmem>>) attributes {dimension_semantics = [#tpu.dimension_semantics<parallel>, #tpu.dimension_semantics<arbitrary>], iteration_bounds = array<i64: 1, 1>, scalar_prefetch = 0 : i64, scratch_operands = 1 : i64, tpu.core_type = #tpu.core_type<tc>, window_params = [{transform_indices = @transform_0, window_bounds = array<i64: 16, 1024>}, {transform_indices = @transform_1, window_bounds = array<i64: 1024, 128>}, {pipeline_mode = #tpu.pipeline_mode<synchronous>, transform_indices = @transform_2, window_bounds = array<i64: 1, 128>}, {pipeline_mode = #tpu.pipeline_mode<synchronous>, transform_indices = @transform_3, window_bounds = array<i64: 128, 128>}, {pipeline_mode = #tpu.pipeline_mode<synchronous>, transform_indices = @transform_4, window_bounds = array<i64: 1, 128>}, {pipeline_mode = #tpu.pipeline_mode<synchronous>, transform_indices = @transform_5, window_bounds = array<i64: 128, 128>}, {pipeline_mode = #tpu.pipeline_mode<synchronous>, transform_indices = @transform_6, window_bounds = array<i64: 1, 128>}, {pipeline_mode = #tpu.pipeline_mode<synchronous>, transform_indices = @transform_7, window_bounds = array<i64: 128, 128>}, {pipeline_mode = #tpu.pipeline_mode<synchronous>, transform_indices = @transform_8, window_bounds = array<i64: 1, 128>}, {transform_indices = @transform_9, window_bounds = array<i64: 16, 128>}]} {
    %c0_i32 = arith.constant 0 : i32
    %0 = arith.cmpi eq, %arg1, %c0_i32 : i32
    %1 = arith.extui %0 : i1 to i32
    %c0_i32_0 = arith.constant 0 : i32
    %2 = arith.cmpi ne, %1, %c0_i32_0 : i32
    scf.if %2 {
      %c0_10 = arith.constant 0 : index
      %c0_11 = arith.constant 0 : index
      %12 = vector.load %arg4[%c0_10, %c0_11] : memref<1x128xf32, #tpu.memory_space<vmem>>, vector<1x128xf32>
      %13 = vector.shape_cast %12 : vector<1x128xf32> to vector<1x128xf32>
      %14 = vector.broadcast %13 : vector<1x128xf32> to vector<16x128xf32>
      %c0_12 = arith.constant 0 : index
      %c0_13 = arith.constant 0 : index
      %15 = vector.load %arg12[%c0_12, %c0_13] : memref<16x128xf32, #tpu.memory_space<vmem>>, vector<16x128xf32>
      tpu.vector_store %arg12[%c0_12, %c0_13], %14 {strides = array<i32>} : memref<16x128xf32, #tpu.memory_space<vmem>>, vector<16x128xf32>,
    } else {
    }
    %c0 = arith.constant 0 : index
    %c0_1 = arith.constant 0 : index
    %3 = vector.load %arg12[%c0, %c0_1] : memref<16x128xf32, #tpu.memory_space<vmem>>, vector<16x128xf32>
    %c0_2 = arith.constant 0 : index
    %c0_3 = arith.constant 0 : index
    %4 = vector.load %arg2[%c0_2, %c0_3] : memref<16x1024xbf16, #tpu.memory_space<vmem>>, vector<16x1024xbf16>
    %c0_4 = arith.constant 0 : index
    %c0_5 = arith.constant 0 : index
    %5 = vector.load %arg3[%c0_4, %c0_5] : memref<1024x128xbf16, #tpu.memory_space<vmem>>, vector<1024x128xbf16>
    %cst = arith.constant dense<0.000000e+00> : vector<16x128xf32>
    %6 = tpu.matmul %4, %5, %cst {dimension_numbers = #tpu.dot_dimension_numbers<[1], [0], [0], [1], [0, 0, 1, 1], [], []>} : vector<16x1024xbf16>, vector<1024x128xbf16>, vector<16x128xf32> -> vector<16x128xf32>
    %7 = arith.addf %3, %6 : vector<16x128xf32>
    %c0_6 = arith.constant 0 : index
    %c0_7 = arith.constant 0 : index
    %8 = vector.load %arg12[%c0_6, %c0_7] : memref<16x128xf32, #tpu.memory_space<vmem>>, vector<16x128xf32>
    tpu.vector_store %arg12[%c0_6, %c0_7], %7 {strides = array<i32>} : memref<16x128xf32, #tpu.memory_space<vmem>>, vector<16x128xf32>,
    %c0_i32_8 = arith.constant 0 : i32
    %9 = arith.cmpi eq, %arg1, %c0_i32_8 : i32
    %10 = arith.extui %9 : i1 to i32
    %c0_i32_9 = arith.constant 0 : i32
    %11 = arith.cmpi ne, %10, %c0_i32_9 : i32
    scf.if %11 {
      %c0_10 = arith.constant 0 : index
      %c0_11 = arith.constant 0 : index
      %12 = vector.load %arg12[%c0_10, %c0_11] : memref<16x128xf32, #tpu.memory_space<vmem>>, vector<16x128xf32>
      %13 = arith.truncf %12 : vector<16x128xf32> to vector<16x128xbf16>
      %c0_12 = arith.constant 0 : index
      %c0_13 = arith.constant 0 : index
      %14 = vector.load %arg5[%c0_12, %c0_13] : memref<128x128xbf16, #tpu.memory_space<vmem>>, vector<128x128xbf16>
      %cst_14 = arith.constant dense<0.000000e+00> : vector<16x128xf32>
      %15 = tpu.matmul %13, %14, %cst_14 {dimension_numbers = #tpu.dot_dimension_numbers<[1], [0], [0], [1], [0, 0, 1, 1], [], []>} : vector<16x128xbf16>, vector<128x128xbf16>, vector<16x128xf32> -> vector<16x128xf32>
      %c0_15 = arith.constant 0 : index
      %c0_16 = arith.constant 0 : index
      %16 = vector.load %arg6[%c0_15, %c0_16] : memref<1x128xf32, #tpu.memory_space<vmem>>, vector<1x128xf32>
      %17 = vector.broadcast %16 : vector<1x128xf32> to vector<16x128xf32>
      %18 = arith.addf %15, %17 : vector<16x128xf32>
      %19 = arith.truncf %18 : vector<16x128xf32> to vector<16x128xbf16>
      %c0_17 = arith.constant 0 : index
      %c0_18 = arith.constant 0 : index
      %20 = vector.load %arg7[%c0_17, %c0_18] : memref<128x128xbf16, #tpu.memory_space<vmem>>, vector<128x128xbf16>
      %cst_19 = arith.constant dense<0.000000e+00> : vector<16x128xf32>
      %21 = tpu.matmul %19, %20, %cst_19 {dimension_numbers = #tpu.dot_dimension_numbers<[1], [0], [0], [1], [0, 0, 1, 1], [], []>} : vector<16x128xbf16>, vector<128x128xbf16>, vector<16x128xf32> -> vector<16x128xf32>
      %c0_20 = arith.constant 0 : index
      %c0_21 = arith.constant 0 : index
      %22 = vector.load %arg8[%c0_20, %c0_21] : memref<1x128xf32, #tpu.memory_space<vmem>>, vector<1x128xf32>
      %23 = vector.broadcast %22 : vector<1x128xf32> to vector<16x128xf32>
      %24 = arith.addf %21, %23 : vector<16x128xf32>
      %25 = arith.truncf %24 : vector<16x128xf32> to vector<16x128xbf16>
      %c0_22 = arith.constant 0 : index
      %c0_23 = arith.constant 0 : index
      %26 = vector.load %arg9[%c0_22, %c0_23] : memref<128x128xbf16, #tpu.memory_space<vmem>>, vector<128x128xbf16>
      %cst_24 = arith.constant dense<0.000000e+00> : vector<16x128xf32>
      %27 = tpu.matmul %25, %26, %cst_24 {dimension_numbers = #tpu.dot_dimension_numbers<[1], [0], [0], [1], [0, 0, 1, 1], [], []>} : vector<16x128xbf16>, vector<128x128xbf16>, vector<16x128xf32> -> vector<16x128xf32>
      %c0_25 = arith.constant 0 : index
      %c0_26 = arith.constant 0 : index
      %28 = vector.load %arg10[%c0_25, %c0_26] : memref<1x128xf32, #tpu.memory_space<vmem>>, vector<1x128xf32>
      %29 = vector.broadcast %28 : vector<1x128xf32> to vector<16x128xf32>
      %30 = arith.addf %27, %29 : vector<16x128xf32>
      %c0_27 = arith.constant 0 : index
      %c0_28 = arith.constant 0 : index
      %31 = vector.load %arg11[%c0_27, %c0_28] : memref<16x128xf32, #tpu.memory_space<vmem>>, vector<16x128xf32>
      tpu.vector_store %arg11[%c0_27, %c0_28], %30 {strides = array<i32>} : memref<16x128xf32, #tpu.memory_space<vmem>>, vector<16x128xf32>,
    } else {
    }
    return
  }
  func.func @transform_0(%arg0: i32, %arg1: i32) -> (i32, i32) {
    %c0_i32 = arith.constant 0 : i32
    return %arg0, %arg1 : i32, i32
  }
  func.func @transform_1(%arg0: i32, %arg1: i32) -> (i32, i32) {
    %c0_i32 = arith.constant 0 : i32
    %c0_i32_0 = arith.constant 0 : i32
    return %arg1, %c0_i32 : i32, i32
  }
  func.func @transform_2(%arg0: i32, %arg1: i32) -> (i32, i32) {
    %c0_i32 = arith.constant 0 : i32
    %c0_i32_0 = arith.constant 0 : i32
    %c0_i32_1 = arith.constant 0 : i32
    return %c0_i32, %c0_i32_0 : i32, i32
  }
  func.func @transform_3(%arg0: i32, %arg1: i32) -> (i32, i32) {
    %c0_i32 = arith.constant 0 : i32
    %c0_i32_0 = arith.constant 0 : i32
    %c0_i32_1 = arith.constant 0 : i32
    return %c0_i32, %c0_i32_0 : i32, i32
  }
  func.func @transform_4(%arg0: i32, %arg1: i32) -> (i32, i32) {
    %c0_i32 = arith.constant 0 : i32
    %c0_i32_0 = arith.constant 0 : i32
    %c0_i32_1 = arith.constant 0 : i32
    return %c0_i32, %c0_i32_0 : i32, i32
  }
  func.func @transform_5(%arg0: i32, %arg1: i32) -> (i32, i32) {
    %c0_i32 = arith.constant 0 : i32
    %c0_i32_0 = arith.constant 0 : i32
    %c0_i32_1 = arith.constant 0 : i32
    return %c0_i32, %c0_i32_0 : i32, i32
  }
  func.func @transform_6(%arg0: i32, %arg1: i32) -> (i32, i32) {
    %c0_i32 = arith.constant 0 : i32
    %c0_i32_0 = arith.constant 0 : i32
    %c0_i32_1 = arith.constant 0 : i32
    return %c0_i32, %c0_i32_0 : i32, i32
  }
  func.func @transform_7(%arg0: i32, %arg1: i32) -> (i32, i32) {
    %c0_i32 = arith.constant 0 : i32
    %c0_i32_0 = arith.constant 0 : i32
    %c0_i32_1 = arith.constant 0 : i32
    return %c0_i32, %c0_i32_0 : i32, i32
  }
  func.func @transform_8(%arg0: i32, %arg1: i32) -> (i32, i32) {
    %c0_i32 = arith.constant 0 : i32
    %c0_i32_0 = arith.constant 0 : i32
    %c0_i32_1 = arith.constant 0 : i32
    return %c0_i32, %c0_i32_0 : i32, i32
  }
  func.func @transform_9(%arg0: i32, %arg1: i32) -> (i32, i32) {
    %c0_i32 = arith.constant 0 : i32
    %c0_i32_0 = arith.constant 0 : i32
    return %arg0, %c0_i32 : i32, i32
  }
}

module attributes {stable_mosaic.version = 11 : i64} {
  func.func @_projection_head_kernel(%arg0: i32, %arg1: i32, %arg2: memref<16x1024xbf16, #tpu.memory_space<vmem>>, %arg3: memref<1024x128xbf16, #tpu.memory_space<vmem>>, %arg4: memref<1x128xf32, #tpu.memory_space<vmem>>, %arg5: memref<128x128xbf16, #tpu.memory_space<vmem>>, %arg6: memref<1x128xf32, #tpu.memory_space<vmem>>, %arg7: memref<128x128xbf16, #tpu.memory_space<vmem>>, %arg8: memref<1x128xf32, #tpu.memory_space<vmem>>, %arg9: memref<128x128xbf16, #tpu.memory_space<vmem>>, %arg10: memref<1x128xf32, #tpu.memory_space<vmem>>, %arg11: memref<16x128xf32, #tpu.memory_space<vmem>>, %arg12: memref<16x128xf32, #tpu.memory_space<vmem>>) attributes {dimension_semantics = [#tpu.dimension_semantics<parallel>, #tpu.dimension_semantics<arbitrary>], iteration_bounds = array<i64: 1, 1>, scalar_prefetch = 0 : i64, scratch_operands = 1 : i64, tpu.core_type = #tpu.core_type<tc>, window_params = [{transform_indices = @transform_0, window_bounds = array<i64: 16, 1024>}, {transform_indices = @transform_1, window_bounds = array<i64: 1024, 128>}, {pipeline_mode = #tpu.pipeline_mode<synchronous>, transform_indices = @transform_2, window_bounds = array<i64: 1, 128>}, {pipeline_mode = #tpu.pipeline_mode<synchronous>, transform_indices = @transform_3, window_bounds = array<i64: 128, 128>}, {pipeline_mode = #tpu.pipeline_mode<synchronous>, transform_indices = @transform_4, window_bounds = array<i64: 1, 128>}, {pipeline_mode = #tpu.pipeline_mode<synchronous>, transform_indices = @transform_5, window_bounds = array<i64: 128, 128>}, {pipeline_mode = #tpu.pipeline_mode<synchronous>, transform_indices = @transform_6, window_bounds = array<i64: 1, 128>}, {pipeline_mode = #tpu.pipeline_mode<synchronous>, transform_indices = @transform_7, window_bounds = array<i64: 128, 128>}, {pipeline_mode = #tpu.pipeline_mode<synchronous>, transform_indices = @transform_8, window_bounds = array<i64: 1, 128>}, {transform_indices = @transform_9, window_bounds = array<i64: 16, 128>}]} {
    %c0_i32 = arith.constant 0 : i32
    %0 = arith.cmpi eq, %arg1, %c0_i32 : i32
    %1 = arith.extui %0 : i1 to i32
    %c0_i32_0 = arith.constant 0 : i32
    %2 = arith.cmpi ne, %1, %c0_i32_0 : i32
    scf.if %2 {
      %c0_10 = arith.constant 0 : index
      %c0_11 = arith.constant 0 : index
      %12 = vector.load %arg4[%c0_10, %c0_11] : memref<1x128xf32, #tpu.memory_space<vmem>>, vector<1x128xf32>
      %13 = vector.shape_cast %12 : vector<1x128xf32> to vector<1x128xf32>
      %14 = vector.broadcast %13 : vector<1x128xf32> to vector<16x128xf32>
      %c0_12 = arith.constant 0 : index
      %c0_13 = arith.constant 0 : index
      %15 = vector.load %arg12[%c0_12, %c0_13] : memref<16x128xf32, #tpu.memory_space<vmem>>, vector<16x128xf32>
      tpu.vector_store %arg12[%c0_12, %c0_13], %14 {strides = array<i32>} : memref<16x128xf32, #tpu.memory_space<vmem>>, vector<16x128xf32>,
    } else {
    }
    %c0 = arith.constant 0 : index
    %c0_1 = arith.constant 0 : index
    %3 = vector.load %arg12[%c0, %c0_1] : memref<16x128xf32, #tpu.memory_space<vmem>>, vector<16x128xf32>
    %c0_2 = arith.constant 0 : index
    %c0_3 = arith.constant 0 : index
    %4 = vector.load %arg2[%c0_2, %c0_3] : memref<16x1024xbf16, #tpu.memory_space<vmem>>, vector<16x1024xbf16>
    %c0_4 = arith.constant 0 : index
    %c0_5 = arith.constant 0 : index
    %5 = vector.load %arg3[%c0_4, %c0_5] : memref<1024x128xbf16, #tpu.memory_space<vmem>>, vector<1024x128xbf16>
    %cst = arith.constant dense<0.000000e+00> : vector<16x128xf32>
    %6 = tpu.matmul %4, %5, %cst {dimension_numbers = #tpu.dot_dimension_numbers<[1], [0], [0], [1], [0, 0, 1, 1], [], []>} : vector<16x1024xbf16>, vector<1024x128xbf16>, vector<16x128xf32> -> vector<16x128xf32>
    %7 = arith.addf %3, %6 : vector<16x128xf32>
    %c0_6 = arith.constant 0 : index
    %c0_7 = arith.constant 0 : index
    %8 = vector.load %arg12[%c0_6, %c0_7] : memref<16x128xf32, #tpu.memory_space<vmem>>, vector<16x128xf32>
    tpu.vector_store %arg12[%c0_6, %c0_7], %7 {strides = array<i32>} : memref<16x128xf32, #tpu.memory_space<vmem>>, vector<16x128xf32>,
    %c0_i32_8 = arith.constant 0 : i32
    %9 = arith.cmpi eq, %arg1, %c0_i32_8 : i32
    %10 = arith.extui %9 : i1 to i32
    %c0_i32_9 = arith.constant 0 : i32
    %11 = arith.cmpi ne, %10, %c0_i32_9 : i32
    scf.if %11 {
      %c0_10 = arith.constant 0 : index
      %c0_11 = arith.constant 0 : index
      %12 = vector.load %arg12[%c0_10, %c0_11] : memref<16x128xf32, #tpu.memory_space<vmem>>, vector<16x128xf32>
      %13 = arith.truncf %12 : vector<16x128xf32> to vector<16x128xbf16>
      %c0_12 = arith.constant 0 : index
      %c0_13 = arith.constant 0 : index
      %14 = vector.load %arg5[%c0_12, %c0_13] : memref<128x128xbf16, #tpu.memory_space<vmem>>, vector<128x128xbf16>
      %cst_14 = arith.constant dense<0.000000e+00> : vector<16x128xf32>
      %15 = tpu.matmul %13, %14, %cst_14 {dimension_numbers = #tpu.dot_dimension_numbers<[1], [0], [0], [1], [0, 0, 1, 1], [], []>} : vector<16x128xbf16>, vector<128x128xbf16>, vector<16x128xf32> -> vector<16x128xf32>
      %c0_15 = arith.constant 0 : index
      %c0_16 = arith.constant 0 : index
      %16 = vector.load %arg6[%c0_15, %c0_16] : memref<1x128xf32, #tpu.memory_space<vmem>>, vector<1x128xf32>
      %17 = vector.broadcast %16 : vector<1x128xf32> to vector<16x128xf32>
      %18 = arith.addf %15, %17 : vector<16x128xf32>
      %19 = arith.truncf %18 : vector<16x128xf32> to vector<16x128xbf16>
      %c0_17 = arith.constant 0 : index
      %c0_18 = arith.constant 0 : index
      %20 = vector.load %arg7[%c0_17, %c0_18] : memref<128x128xbf16, #tpu.memory_space<vmem>>, vector<128x128xbf16>
      %cst_19 = arith.constant dense<0.000000e+00> : vector<16x128xf32>
      %21 = tpu.matmul %19, %20, %cst_19 {dimension_numbers = #tpu.dot_dimension_numbers<[1], [0], [0], [1], [0, 0, 1, 1], [], []>} : vector<16x128xbf16>, vector<128x128xbf16>, vector<16x128xf32> -> vector<16x128xf32>
      %c0_20 = arith.constant 0 : index
      %c0_21 = arith.constant 0 : index
      %22 = vector.load %arg8[%c0_20, %c0_21] : memref<1x128xf32, #tpu.memory_space<vmem>>, vector<1x128xf32>
      %23 = vector.broadcast %22 : vector<1x128xf32> to vector<16x128xf32>
      %24 = arith.addf %21, %23 : vector<16x128xf32>
      %25 = arith.truncf %24 : vector<16x128xf32> to vector<16x128xbf16>
      %c0_22 = arith.constant 0 : index
      %c0_23 = arith.constant 0 : index
      %26 = vector.load %arg9[%c0_22, %c0_23] : memref<128x128xbf16, #tpu.memory_space<vmem>>, vector<128x128xbf16>
      %cst_24 = arith.constant dense<0.000000e+00> : vector<16x128xf32>
      %27 = tpu.matmul %25, %26, %cst_24 {dimension_numbers = #tpu.dot_dimension_numbers<[1], [0], [0], [1], [0, 0, 1, 1], [], []>} : vector<16x128xbf16>, vector<128x128xbf16>, vector<16x128xf32> -> vector<16x128xf32>
      %c0_25 = arith.constant 0 : index
      %c0_26 = arith.constant 0 : index
      %28 = vector.load %arg10[%c0_25, %c0_26] : memref<1x128xf32, #tpu.memory_space<vmem>>, vector<1x128xf32>
      %29 = vector.broadcast %28 : vector<1x128xf32> to vector<16x128xf32>
      %30 = arith.addf %27, %29 : vector<16x128xf32>
      %c0_27 = arith.constant 0 : index
      %c0_28 = arith.constant 0 : index
      %31 = vector.load %arg11[%c0_27, %c0_28] : memref<16x128xf32, #tpu.memory_space<vmem>>, vector<16x128xf32>
      tpu.vector_store %arg11[%c0_27, %c0_28], %30 {strides = array<i32>} : memref<16x128xf32, #tpu.memory_space<vmem>>, vector<16x128xf32>,
    } else {
    }
    return
  }
  func.func @transform_0(%arg0: i32, %arg1: i32) -> (i32, i32) {
    %c0_i32 = arith.constant 0 : i32
    return %arg0, %arg1 : i32, i32
  }
  func.func @transform_1(%arg0: i32, %arg1: i32) -> (i32, i32) {
    %c0_i32 = arith.constant 0 : i32
    %c0_i32_0 = arith.constant 0 : i32
    return %arg1, %c0_i32 : i32, i32
  }
  func.func @transform_2(%arg0: i32, %arg1: i32) -> (i32, i32) {
    %c0_i32 = arith.constant 0 : i32
    %c0_i32_0 = arith.constant 0 : i32
    %c0_i32_1 = arith.constant 0 : i32
    return %c0_i32, %c0_i32_0 : i32, i32
  }
  func.func @transform_3(%arg0: i32, %arg1: i32) -> (i32, i32) {
    %c0_i32 = arith.constant 0 : i32
    %c0_i32_0 = arith.constant 0 : i32
    %c0_i32_1 = arith.constant 0 : i32
    return %c0_i32, %c0_i32_0 : i32, i32
  }
  func.func @transform_4(%arg0: i32, %arg1: i32) -> (i32, i32) {
    %c0_i32 = arith.constant 0 : i32
    %c0_i32_0 = arith.constant 0 : i32
    %c0_i32_1 = arith.constant 0 : i32
    return %c0_i32, %c0_i32_0 : i32, i32
  }
  func.func @transform_5(%arg0: i32, %arg1: i32) -> (i32, i32) {
    %c0_i32 = arith.constant 0 : i32
    %c0_i32_0 = arith.constant 0 : i32
    %c0_i32_1 = arith.constant 0 : i32
    return %c0_i32, %c0_i32_0 : i32, i32
  }
  func.func @transform_6(%arg0: i32, %arg1: i32) -> (i32, i32) {
    %c0_i32 = arith.constant 0 : i32
    %c0_i32_0 = arith.constant 0 : i32
    %c0_i32_1 = arith.constant 0 : i32
    return %c0_i32, %c0_i32_0 : i32, i32
  }
  func.func @transform_7(%arg0: i32, %arg1: i32) -> (i32, i32) {
    %c0_i32 = arith.constant 0 : i32
    %c0_i32_0 = arith.constant 0 : i32
    %c0_i32_1 = arith.constant 0 : i32
    return %c0_i32, %c0_i32_0 : i32, i32
  }
  func.func @transform_8(%arg0: i32, %arg1: i32) -> (i32, i32) {
    %c0_i32 = arith.constant 0 : i32
    %c0_i32_0 = arith.constant 0 : i32
    %c0_i32_1 = arith.constant 0 : i32
    return %c0_i32, %c0_i32_0 : i32, i32
  }
  func.func @transform_9(%arg0: i32, %arg1: i32) -> (i32, i32) {
    %c0_i32 = arith.constant 0 : i32
    %c0_i32_0 = arith.constant 0 : i32
    return %arg0, %c0_i32 : i32, i32
  }
}

</mosaic_0001>

<llo_original>
// kernel: tpu_custom_call.1
$region0: #{tpu_custom_call.1}
  #allocation0 [shape = 'u32[]', space=smem, size = 0x4, offset = 0x4, fixed_abs, tag = 'smem constant byte address 0x4 - core index']
  #allocation1 [shape = 'u32[144,128]{1,0:T(1,128)}', space=vmem, size = 0x12000, scoped, tag = 'internal scratch']
  #allocation2 [shape = 'f32[16,128]{1,0:T(8,128)}', space=vmem, size = 0x2000, scoped, tag = 'scratch operand']
  %s0 = inlined_call_operand.hbm [shape: bf16[16,1024], index: 0, kind: input, shape index: {}]
  %s1 = inlined_call_operand.hbm [shape: bf16[1024,128], index: 1, kind: input, shape index: {}]
  %s2 = inlined_call_operand.vmem [shape: f32[1,128], index: 2, kind: input, shape index: {}]
  %s3 = inlined_call_operand.hbm [shape: bf16[128,128], index: 3, kind: input, shape index: {}]
  %s4 = inlined_call_operand.vmem [shape: f32[1,128], index: 4, kind: input, shape index: {}]
  %s5 = inlined_call_operand.hbm [shape: bf16[128,128], index: 5, kind: input, shape index: {}]
  %s6 = inlined_call_operand.vmem [shape: f32[1,128], index: 6, kind: input, shape index: {}]
  %s7 = inlined_call_operand.hbm [shape: bf16[128,128], index: 7, kind: input, shape index: {}]
  %s8 = inlined_call_operand.vmem [shape: f32[1,128], index: 8, kind: input, shape index: {}]
  %s9 = inlined_call_operand.hbm [shape: f32[16,128], index: 9, kind: output, shape index: {}]
  %s10 = sld [smem:[#allocation0]]
  $region74: #{tpu_custom_call.1} parent=0
    _
  %s12 = ssub.s32 1, %s10
  %s13 = scalar_select 0, %s12, %s10
  $region1: #{tpu_custom_call.1} parent=0
    #allocation3 [shape = 'u8[32768]{0}', space=vmem, size = 0x8000, scoped, tag = 'input window, operand 0, single buffered']
    #allocation4 [shape = 's32[1]{0}', space=sflag, size = 0x4, scoped, tag = 'scoped memory for tpu_custom_call.1']
    #allocation5 [shape = 's32[1]{0}', space=sflag, size = 0x4, scoped, tag = 'scoped memory for tpu_custom_call.1']
    #allocation6 [shape = 'u8[262144]{0}', space=vmem, size = 0x40000, scoped, tag = 'input window, operand 1, single buffered']
    #allocation7 [shape = 's32[1]{0}', space=sflag, size = 0x4, scoped, tag = 'scoped memory for tpu_custom_call.1']
    #allocation8 [shape = 'u8[32768]{0}', space=vmem, size = 0x8000, scoped, tag = 'input window, operand 3, single buffered']
    #allocation9 [shape = 'u8[32768]{0}', space=vmem, size = 0x8000, scoped, tag = 'input window, operand 5, single buffered']
    #allocation10 [shape = 's32[1]{0}', space=sflag, size = 0x4, scoped, tag = 'scoped memory for tpu_custom_call.1']
    #allocation11 [shape = 'u8[32768]{0}', space=vmem, size = 0x8000, scoped, tag = 'input window, operand 7, single buffered']
    #allocation12 [shape = 'u8[8192]{0}', space=vmem, size = 0x2000, scoped, tag = 'output window, operand 0, single buffered']
    %14 = vsyncpa [#allocation4], 0
    %15 = vsyncpa [#allocation7], 0
    %16 = vsyncpa [#allocation10], 0
    %17 = vsyncpa [#allocation5], 0
    // Predicated region
    $region2: #{tpu_custom_call.1} parent=1 // pred_check
      _
    $region3: #{tpu_custom_call.1} parent=1 // pred_check_branch
      %19 = sbr.rel (0) target = $region5
    $region4: #{tpu_custom_call.1} parent=1 // pred_region
      %s21 = ssub.s32 1024, 1024
      %22 = vsyncadd [#allocation4], %s21
      %s23 = sshll.u32 [#allocation3], 4
      %s24 = int_to_ptr.vmem [resolvable:$true] %s23
      %29 = dma.hbm_to_vmem [thread:$0]  %s0, 1024, %s24, [#allocation4], 512, 512, 32
    $region5: #{tpu_custom_call.1} parent=1 // pred_fallthru
      _
    // Predicated region
    $region6: #{tpu_custom_call.1} parent=1 // pred_check
      _
    $region7: #{tpu_custom_call.1} parent=1 // pred_check_branch
      %31 = sbr.rel (0) target = $region9
    $region8: #{tpu_custom_call.1} parent=1 // pred_region
      %s33 = ssub.s32 8192, 8192
      %34 = vsyncadd [#allocation7], %s33
      %s35 = sshll.u32 [#allocation6], 4
      %s36 = int_to_ptr.vmem [resolvable:$true] %s35
      %41 = dma.hbm_to_vmem [thread:$0]  %s1, 8192, %s36, [#allocation7], 64, 64, 4
    $region9: #{tpu_custom_call.1} parent=1 // pred_fallthru
      _
    // Predicated region
    $region10: #{tpu_custom_call.1} parent=1 // pred_check
      _
    $region11: #{tpu_custom_call.1} parent=1 // pred_check_branch
      %43 = sbr.rel (0) target = $region13
    $region12: #{tpu_custom_call.1} parent=1 // pred_region
      _
    $region13: #{tpu_custom_call.1} parent=1 // pred_fallthru
      _
    // Predicated region
    $region14: #{tpu_custom_call.1} parent=1 // pred_check
      _
    $region15: #{tpu_custom_call.1} parent=1 // pred_check_branch
      %45 = sbr.rel (0) target = $region17
    $region16: #{tpu_custom_call.1} parent=1 // pred_region
      %s47 = ssub.s32 1024, 1024
      %48 = vsyncadd [#allocation7], %s47
      %s49 = sshll.u32 [#allocation8], 4
      %s50 = int_to_ptr.vmem [resolvable:$true] %s49
      %55 = dma.hbm_to_vmem [thread:$0]  %s3, 1024, %s50, [#allocation7], 64, 64, 4
    $region17: #{tpu_custom_call.1} parent=1 // pred_fallthru
      _
    // Predicated region
    $region18: #{tpu_custom_call.1} parent=1 // pred_check
      _
    $region19: #{tpu_custom_call.1} parent=1 // pred_check_branch
      %57 = sbr.rel (0) target = $region21
    $region20: #{tpu_custom_call.1} parent=1 // pred_region
      _
    $region21: #{tpu_custom_call.1} parent=1 // pred_fallthru
      _
    // Predicated region
    $region22: #{tpu_custom_call.1} parent=1 // pred_check
      _
    $region23: #{tpu_custom_call.1} parent=1 // pred_check_branch
      %59 = sbr.rel (0) target = $region25
    $region24: #{tpu_custom_call.1} parent=1 // pred_region
      %s61 = ssub.s32 1024, 1024
      %62 = vsyncadd [#allocation10], %s61
      %s63 = sshll.u32 [#allocation9], 4
      %s64 = int_to_ptr.vmem [resolvable:$true] %s63
      %69 = dma.hbm_to_vmem [thread:$0]  %s5, 1024, %s64, [#allocation10], 64, 64, 4
    $region25: #{tpu_custom_call.1} parent=1 // pred_fallthru
      _
    // Predicated region
    $region26: #{tpu_custom_call.1} parent=1 // pred_check
      _
    $region27: #{tpu_custom_call.1} parent=1 // pred_check_branch
      %71 = sbr.rel (0) target = $region29
    $region28: #{tpu_custom_call.1} parent=1 // pred_region
      _
    $region29: #{tpu_custom_call.1} parent=1 // pred_fallthru
      _
    // Predicated region
    $region30: #{tpu_custom_call.1} parent=1 // pred_check
      _
    $region31: #{tpu_custom_call.1} parent=1 // pred_check_branch
      %73 = sbr.rel (0) target = $region33
    $region32: #{tpu_custom_call.1} parent=1 // pred_region
      %s75 = ssub.s32 1024, 1024
      %76 = vsyncadd [#allocation10], %s75
      %s77 = sshll.u32 [#allocation11], 4
      %s78 = int_to_ptr.vmem [resolvable:$true] %s77
      %83 = dma.hbm_to_vmem [thread:$0]  %s7, 1024, %s78, [#allocation10], 64, 64, 4
    $region33: #{tpu_custom_call.1} parent=1 // pred_fallthru
      _
    // Predicated region
    $region34: #{tpu_custom_call.1} parent=1 // pred_check
      _
    $region35: #{tpu_custom_call.1} parent=1 // pred_check_branch
      %85 = sbr.rel (0) target = $region37
    $region36: #{tpu_custom_call.1} parent=1 // pred_region
      _
    $region37: #{tpu_custom_call.1} parent=1 // pred_fallthru
      _
    // Predicated region
    $region38: #{tpu_custom_call.1} parent=1 // pred_check
      _
    $region39: #{tpu_custom_call.1} parent=1 // pred_check_branch
      %87 = sbr.rel (0) target = $region41
    $region40: #{tpu_custom_call.1} parent=1 // pred_region
      %88 = dma.done [#allocation4], 1024
    $region41: #{tpu_custom_call.1} parent=1 // pred_fallthru
      _
    // Predicated region
    $region42: #{tpu_custom_call.1} parent=1 // pred_check
      _
    $region43: #{tpu_custom_call.1} parent=1 // pred_check_branch
      %90 = sbr.rel (0) target = $region45
    $region44: #{tpu_custom_call.1} parent=1 // pred_region
      %91 = dma.done [#allocation7], 8192
    $region45: #{tpu_custom_call.1} parent=1 // pred_fallthru
      _
    // Predicated region
    $region46: #{tpu_custom_call.1} parent=1 // pred_check
      _
    $region47: #{tpu_custom_call.1} parent=1 // pred_check_branch
      %93 = sbr.rel (0) target = $region49
    $region48: #{tpu_custom_call.1} parent=1 // pred_region
      %94 = dma.done [#allocation7], 1024
    $region49: #{tpu_custom_call.1} parent=1 // pred_fallthru
      _
    // Predicated region
    $region50: #{tpu_custom_call.1} parent=1 // pred_check
      _
    $region51: #{tpu_custom_call.1} parent=1 // pred_check_branch
      %96 = sbr.rel (0) target = $region53
    $region52: #{tpu_custom_call.1} parent=1 // pred_region
      %97 = dma.done [#allocation10], 1024
    $region53: #{tpu_custom_call.1} parent=1 // pred_fallthru
      _
    // Predicated region
    $region54: #{tpu_custom_call.1} parent=1 // pred_check
      _
    $region55: #{tpu_custom_call.1} parent=1 // pred_check_branch
      %99 = sbr.rel (0) target = $region57
    $region56: #{tpu_custom_call.1} parent=1 // pred_region
      %100 = dma.done [#allocation10], 1024
    $region57: #{tpu_custom_call.1} parent=1 // pred_fallthru
      _
    %p102 = scmp.eq.s32.totalorder 0, 0
    // Predicated region
    $region58: #{tpu_custom_call.1} parent=1 // pred_check
      %p103 = pneg %p102
    $region59: #{tpu_custom_call.1} parent=1 // pred_check_branch
      %105 = sbr.rel (%p103) target = $region61
    $region60: #{tpu_custom_call.1} parent=1 // pred_region
      %v106 = vld [vmem:[%s2] sm:$0x1]
      %v108 = vlaneseq
      %v109 = vshrl.u32 %v108, 7
      %v110 = vsub.s32 0, %v109
      %v111 = vrot.slane %v106, %v110
      %113 = vst [vmem:[#allocation2] sm:$0xff] %v111
      %114 = vst [vmem:[#allocation2 + $0x8] sm:$0xff] %v111
    $region61: #{tpu_custom_call.1} parent=1 // pred_fallthru
      _
    %v115 = vld [vmem:[#allocation2] sm:$0xff]
    %v116 = vld [vmem:[#allocation2 + $0x8] sm:$0xff]
    %v117 = vld [vmem:[#allocation3] sm:$0xff]
    %v118 = vld [vmem:[#allocation3 + $0x8] sm:$0xff]
    %v119 = vld [vmem:[#allocation3 + $0x10] sm:$0xff]
    %v120 = vld [vmem:[#allocation3 + $0x18] sm:$0xff]
    %v121 = vld [vmem:[#allocation3 + $0x20] sm:$0xff]
    %v122 = vld [vmem:[#allocation3 + $0x28] sm:$0xff]
    %v123 = vld [vmem:[#allocation3 + $0x30] sm:$0xff]
    %v124 = vld [vmem:[#allocation3 + $0x38] sm:$0xff]
    %v125 = vld [vmem:[#allocation6] sm:$0xf]
    %v126 = vld [vmem:[#allocation6 + $0x4] sm:$0xf]
    %v127 = vld [vmem:[#allocation6 + $0x8] sm:$0xf]
    %v128 = vld [vmem:[#allocation6 + $0xc] sm:$0xf]
    %v129 = vld [vmem:[#allocation6 + $0x10] sm:$0xf]
    %v130 = vld [vmem:[#allocation6 + $0x14] sm:$0xf]
    %v131 = vld [vmem:[#allocation6 + $0x18] sm:$0xf]
    %v132 = vld [vmem:[#allocation6 + $0x1c] sm:$0xf]
    %v133 = vld [vmem:[#allocation6 + $0x20] sm:$0xf]
    %v134 = vld [vmem:[#allocation6 + $0x24] sm:$0xf]
    %v135 = vld [vmem:[#allocation6 + $0x28] sm:$0xf]
    %v136 = vld [vmem:[#allocation6 + $0x2c] sm:$0xf]
    %v137 = vld [vmem:[#allocation6 + $0x30] sm:$0xf]
    %v138 = vld [vmem:[#allocation6 + $0x34] sm:$0xf]
    %v139 = vld [vmem:[#allocation6 + $0x38] sm:$0xf]
    %v140 = vld [vmem:[#allocation6 + $0x3c] sm:$0xf]
    %v141 = vld [vmem:[#allocation6 + $0x40] sm:$0xf]
    %v142 = vld [vmem:[#allocation6 + $0x44] sm:$0xf]
    %v143 = vld [vmem:[#allocation6 + $0x48] sm:$0xf]
    %v144 = vld [vmem:[#allocation6 + $0x4c] sm:$0xf]
    %v145 = vld [vmem:[#allocation6 + $0x50] sm:$0xf]
    %v146 = vld [vmem:[#allocation6 + $0x54] sm:$0xf]
    %v147 = vld [vmem:[#allocation6 + $0x58] sm:$0xf]
    %v148 = vld [vmem:[#allocation6 + $0x5c] sm:$0xf]
    %v149 = vld [vmem:[#allocation6 + $0x60] sm:$0xf]
    %v150 = vld [vmem:[#allocation6 + $0x64] sm:$0xf]
    %v151 = vld [vmem:[#allocation6 + $0x68] sm:$0xf]
    %v152 = vld [vmem:[#allocation6 + $0x6c] sm:$0xf]
    %v153 = vld [vmem:[#allocation6 + $0x70] sm:$0xf]
    %v154 = vld [vmem:[#allocation6 + $0x74] sm:$0xf]
    %v155 = vld [vmem:[#allocation6 + $0x78] sm:$0xf]
    %v156 = vld [vmem:[#allocation6 + $0x7c] sm:$0xf]
    %v157 = vld [vmem:[#allocation6 + $0x80] sm:$0xf]
    %v158 = vld [vmem:[#allocation6 + $0x84] sm:$0xf]
    %v159 = vld [vmem:[#allocation6 + $0x88] sm:$0xf]
    %v160 = vld [vmem:[#allocation6 + $0x8c] sm:$0xf]
    %v161 = vld [vmem:[#allocation6 + $0x90] sm:$0xf]
    %v162 = vld [vmem:[#allocation6 + $0x94] sm:$0xf]
    %v163 = vld [vmem:[#allocation6 + $0x98] sm:$0xf]
    %v164 = vld [vmem:[#allocation6 + $0x9c] sm:$0xf]
    %v165 = vld [vmem:[#allocation6 + $0xa0] sm:$0xf]
    %v166 = vld [vmem:[#allocation6 + $0xa4] sm:$0xf]
    %v167 = vld [vmem:[#allocation6 + $0xa8] sm:$0xf]
    %v168 = vld [vmem:[#allocation6 + $0xac] sm:$0xf]
    %v169 = vld [vmem:[#allocation6 + $0xb0] sm:$0xf]
    %v170 = vld [vmem:[#allocation6 + $0xb4] sm:$0xf]
    %v171 = vld [vmem:[#allocation6 + $0xb8] sm:$0xf]
    %v172 = vld [vmem:[#allocation6 + $0xbc] sm:$0xf]
    %v173 = vld [vmem:[#allocation6 + $0xc0] sm:$0xf]
    %v174 = vld [vmem:[#allocation6 + $0xc4] sm:$0xf]
    %v175 = vld [vmem:[#allocation6 + $0xc8] sm:$0xf]
    %v176 = vld [vmem:[#allocation6 + $0xcc] sm:$0xf]
    %v177 = vld [vmem:[#allocation6 + $0xd0] sm:$0xf]
    %v178 = vld [vmem:[#allocation6 + $0xd4] sm:$0xf]
    %v179 = vld [vmem:[#allocation6 + $0xd8] sm:$0xf]
    %v180 = vld [vmem:[#allocation6 + $0xdc] sm:$0xf]
    %v181 = vld [vmem:[#allocation6 + $0xe0] sm:$0xf]
    %v182 = vld [vmem:[#allocation6 + $0xe4] sm:$0xf]
    %v183 = vld [vmem:[#allocation6 + $0xe8] sm:$0xf]
    %v184 = vld [vmem:[#allocation6 + $0xec] sm:$0xf]
    %v185 = vld [vmem:[#allocation6 + $0xf0] sm:$0xf]
    %v186 = vld [vmem:[#allocation6 + $0xf4] sm:$0xf]
    %v187 = vld [vmem:[#allocation6 + $0xf8] sm:$0xf]
    %v188 = vld [vmem:[#allocation6 + $0xfc] sm:$0xf]
    %v189 = vld [vmem:[#allocation6 + $0x100] sm:$0xf]
    %v190 = vld [vmem:[#allocation6 + $0x104] sm:$0xf]
    %v191 = vld [vmem:[#allocation6 + $0x108] sm:$0xf]
    %v192 = vld [vmem:[#allocation6 + $0x10c] sm:$0xf]
    %v193 = vld [vmem:[#allocation6 + $0x110] sm:$0xf]
    %v194 = vld [vmem:[#allocation6 + $0x114] sm:$0xf]
    %v195 = vld [vmem:[#allocation6 + $0x118] sm:$0xf]
    %v196 = vld [vmem:[#allocation6 + $0x11c] sm:$0xf]
    %v197 = vld [vmem:[#allocation6 + $0x120] sm:$0xf]
    %v198 = vld [vmem:[#allocation6 + $0x124] sm:$0xf]
    %v199 = vld [vmem:[#allocation6 + $0x128] sm:$0xf]
    %v200 = vld [vmem:[#allocation6 + $0x12c] sm:$0xf]
    %v201 = vld [vmem:[#allocation6 + $0x130] sm:$0xf]
    %v202 = vld [vmem:[#allocation6 + $0x134] sm:$0xf]
    %v203 = vld [vmem:[#allocation6 + $0x138] sm:$0xf]
    %v204 = vld [vmem:[#allocation6 + $0x13c] sm:$0xf]
    %v205 = vld [vmem:[#allocation6 + $0x140] sm:$0xf]
    %v206 = vld [vmem:[#allocation6 + $0x144] sm:$0xf]
    %v207 = vld [vmem:[#allocation6 + $0x148] sm:$0xf]
    %v208 = vld [vmem:[#allocation6 + $0x14c] sm:$0xf]
    %v209 = vld [vmem:[#allocation6 + $0x150] sm:$0xf]
    %v210 = vld [vmem:[#allocation6 + $0x154] sm:$0xf]
    %v211 = vld [vmem:[#allocation6 + $0x158] sm:$0xf]
    %v212 = vld [vmem:[#allocation6 + $0x15c] sm:$0xf]
    %v213 = vld [vmem:[#allocation6 + $0x160] sm:$0xf]
    %v214 = vld [vmem:[#allocation6 + $0x164] sm:$0xf]
    %v215 = vld [vmem:[#allocation6 + $0x168] sm:$0xf]
    %v216 = vld [vmem:[#allocation6 + $0x16c] sm:$0xf]
    %v217 = vld [vmem:[#allocation6 + $0x170] sm:$0xf]
    %v218 = vld [vmem:[#allocation6 + $0x174] sm:$0xf]
    %v219 = vld [vmem:[#allocation6 + $0x178] sm:$0xf]
    %v220 = vld [vmem:[#allocation6 + $0x17c] sm:$0xf]
    %v221 = vld [vmem:[#allocation6 + $0x180] sm:$0xf]
    %v222 = vld [vmem:[#allocation6 + $0x184] sm:$0xf]
    %v223 = vld [vmem:[#allocation6 + $0x188] sm:$0xf]
    %v224 = vld [vmem:[#allocation6 + $0x18c] sm:$0xf]
    %v225 = vld [vmem:[#allocation6 + $0x190] sm:$0xf]
    %v226 = vld [vmem:[#allocation6 + $0x194] sm:$0xf]
    %v227 = vld [vmem:[#allocation6 + $0x198] sm:$0xf]
    %v228 = vld [vmem:[#allocation6 + $0x19c] sm:$0xf]
    %v229 = vld [vmem:[#allocation6 + $0x1a0] sm:$0xf]
    %v230 = vld [vmem:[#allocation6 + $0x1a4] sm:$0xf]
    %v231 = vld [vmem:[#allocation6 + $0x1a8] sm:$0xf]
    %v232 = vld [vmem:[#allocation6 + $0x1ac] sm:$0xf]
    %v233 = vld [vmem:[#allocation6 + $0x1b0] sm:$0xf]
    %v234 = vld [vmem:[#allocation6 + $0x1b4] sm:$0xf]
    %v235 = vld [vmem:[#allocation6 + $0x1b8] sm:$0xf]
    %v236 = vld [vmem:[#allocation6 + $0x1bc] sm:$0xf]
    %v237 = vld [vmem:[#allocation6 + $0x1c0] sm:$0xf]
    %v238 = vld [vmem:[#allocation6 + $0x1c4] sm:$0xf]
    %v239 = vld [vmem:[#allocation6 + $0x1c8] sm:$0xf]
    %v240 = vld [vmem:[#allocation6 + $0x1cc] sm:$0xf]
    %v241 = vld [vmem:[#allocation6 + $0x1d0] sm:$0xf]
    %v242 = vld [vmem:[#allocation6 + $0x1d4] sm:$0xf]
    %v243 = vld [vmem:[#allocation6 + $0x1d8] sm:$0xf]
    %v244 = vld [vmem:[#allocation6 + $0x1dc] sm:$0xf]
    %v245 = vld [vmem:[#allocation6 + $0x1e0] sm:$0xf]
    %v246 = vld [vmem:[#allocation6 + $0x1e4] sm:$0xf]
    %v247 = vld [vmem:[#allocation6 + $0x1e8] sm:$0xf]
    %v248 = vld [vmem:[#allocation6 + $0x1ec] sm:$0xf]
    %v249 = vld [vmem:[#allocation6 + $0x1f0] sm:$0xf]
    %v250 = vld [vmem:[#allocation6 + $0x1f4] sm:$0xf]
    %v251 = vld [vmem:[#allocation6 + $0x1f8] sm:$0xf]
    %v252 = vld [vmem:[#allocation6 + $0x1fc] sm:$0xf]
    %v261 = vunpack.c.l.b16 %v117
    %v262 = vunpack.c.h.b16 %v117
    %v263 = vunpack.c.l.b16 %v118
    %v264 = vunpack.c.h.b16 %v118
    %v265 = vunpack.c.l.b16 %v119
    %v266 = vunpack.c.h.b16 %v119
    %v267 = vunpack.c.l.b16 %v120
    %v268 = vunpack.c.h.b16 %v120
    %v269 = vunpack.c.l.b16 %v121
    %v270 = vunpack.c.h.b16 %v121
    %v271 = vunpack.c.l.b16 %v122
    %v272 = vunpack.c.h.b16 %v122
    %v273 = vunpack.c.l.b16 %v123
    %v274 = vunpack.c.h.b16 %v123
    %v275 = vunpack.c.l.b16 %v124
    %v276 = vunpack.c.h.b16 %v124
    %v277 = vpack.c.b16 %v269, %v261
    %v278 = vpack.c.b16 %v270, %v262
    %v279 = vpack.c.b16 %v271, %v263
    %v280 = vpack.c.b16 %v272, %v264
    %v281 = vpack.c.b16 %v273, %v265
    %v282 = vpack.c.b16 %v274, %v266
    %v283 = vpack.c.b16 %v275, %v267
    %v284 = vpack.c.b16 %v276, %v268
    %v421 = vunpack.c.l.b16 %v125
    %v422 = vunpack.c.l.b16 %v126
    %v423 = vunpack.c.l.b16 %v127
    %v424 = vunpack.c.l.b16 %v128
    %v425 = vunpack.c.l.b16 %v129
    %v426 = vunpack.c.l.b16 %v130
    %v427 = vunpack.c.l.b16 %v131
    %v428 = vunpack.c.l.b16 %v132
    %v429 = vunpack.c.l.b16 %v133
    %v430 = vunpack.c.l.b16 %v134
    %v431 = vunpack.c.l.b16 %v135
    %v432 = vunpack.c.l.b16 %v136
    %v433 = vunpack.c.l.b16 %v137
    %v434 = vunpack.c.l.b16 %v138
    %v435 = vunpack.c.l.b16 %v139
    %v436 = vunpack.c.l.b16 %v140
    %v437 = vunpack.c.l.b16 %v141
    %v438 = vunpack.c.l.b16 %v142
    %v439 = vunpack.c.l.b16 %v143
    %v440 = vunpack.c.l.b16 %v144
    %v441 = vunpack.c.l.b16 %v145
    %v442 = vunpack.c.l.b16 %v146
    %v443 = vunpack.c.l.b16 %v147
    %v444 = vunpack.c.l.b16 %v148
    %v445 = vunpack.c.l.b16 %v149
    %v446 = vunpack.c.l.b16 %v150
    %v447 = vunpack.c.l.b16 %v151
    %v448 = vunpack.c.l.b16 %v152
    %v449 = vunpack.c.l.b16 %v153
    %v450 = vunpack.c.l.b16 %v154
    %v451 = vunpack.c.l.b16 %v155
    %v452 = vunpack.c.l.b16 %v156
    %v453 = vunpack.c.l.b16 %v157
    %v454 = vunpack.c.l.b16 %v158
    %v455 = vunpack.c.l.b16 %v159
    %v456 = vunpack.c.l.b16 %v160
    %v457 = vunpack.c.l.b16 %v161
    %v458 = vunpack.c.l.b16 %v162
    %v459 = vunpack.c.l.b16 %v163
    %v460 = vunpack.c.l.b16 %v164
    %v461 = vunpack.c.l.b16 %v165
    %v462 = vunpack.c.l.b16 %v166
    %v463 = vunpack.c.l.b16 %v167
    %v464 = vunpack.c.l.b16 %v168
    %v465 = vunpack.c.l.b16 %v169
    %v466 = vunpack.c.l.b16 %v170
    %v467 = vunpack.c.l.b16 %v171
    %v468 = vunpack.c.l.b16 %v172
    %v469 = vunpack.c.l.b16 %v173
    %v470 = vunpack.c.l.b16 %v174
    %v471 = vunpack.c.l.b16 %v175
    %v472 = vunpack.c.l.b16 %v176
    %v473 = vunpack.c.l.b16 %v177
    %v474 = vunpack.c.l.b16 %v178
    %v475 = vunpack.c.l.b16 %v179
    %v476 = vunpack.c.l.b16 %v180
    %v477 = vunpack.c.l.b16 %v181
    %v478 = vunpack.c.l.b16 %v182
    %v479 = vunpack.c.l.b16 %v183
    %v480 = vunpack.c.l.b16 %v184
    %v481 = vunpack.c.l.b16 %v185
    %v482 = vunpack.c.l.b16 %v186
    %v483 = vunpack.c.l.b16 %v187
    %v484 = vunpack.c.l.b16 %v188
    %v485 = vunpack.c.l.b16 %v189
    %v486 = vunpack.c.l.b16 %v190
    %v487 = vunpack.c.l.b16 %v191
    %v488 = vunpack.c.l.b16 %v192
    %v489 = vunpack.c.l.b16 %v193
    %v490 = vunpack.c.l.b16 %v194
    %v491 = vunpack.c.l.b16 %v195
    %v492 = vunpack.c.l.b16 %v196
    %v493 = vunpack.c.l.b16 %v197
    %v494 = vunpack.c.l.b16 %v198
    %v495 = vunpack.c.l.b16 %v199
    %v496 = vunpack.c.l.b16 %v200
    %v497 = vunpack.c.l.b16 %v201
    %v498 = vunpack.c.l.b16 %v202
    %v499 = vunpack.c.l.b16 %v203
    %v500 = vunpack.c.l.b16 %v204
    %v501 = vunpack.c.l.b16 %v205
    %v502 = vunpack.c.l.b16 %v206
    %v503 = vunpack.c.l.b16 %v207
    %v504 = vunpack.c.l.b16 %v208
    %v505 = vunpack.c.l.b16 %v209
    %v506 = vunpack.c.l.b16 %v210
    %v507 = vunpack.c.l.b16 %v211
    %v508 = vunpack.c.l.b16 %v212
    %v509 = vunpack.c.l.b16 %v213
    %v510 = vunpack.c.l.b16 %v214
    %v511 = vunpack.c.l.b16 %v215
    %v512 = vunpack.c.l.b16 %v216
    %v513 = vunpack.c.l.b16 %v217
    %v514 = vunpack.c.l.b16 %v218
    %v515 = vunpack.c.l.b16 %v219
    %v516 = vunpack.c.l.b16 %v220
    %v517 = vunpack.c.l.b16 %v221
    %v518 = vunpack.c.l.b16 %v222
    %v519 = vunpack.c.l.b16 %v223
    %v520 = vunpack.c.l.b16 %v224
    %v521 = vunpack.c.l.b16 %v225
    %v522 = vunpack.c.l.b16 %v226
    %v523 = vunpack.c.l.b16 %v227
    %v524 = vunpack.c.l.b16 %v228
    %v525 = vunpack.c.l.b16 %v229
    %v526 = vunpack.c.l.b16 %v230
    %v527 = vunpack.c.l.b16 %v231
    %v528 = vunpack.c.l.b16 %v232
    %v529 = vunpack.c.l.b16 %v233
    %v530 = vunpack.c.l.b16 %v234
    %v531 = vunpack.c.l.b16 %v235
    %v532 = vunpack.c.l.b16 %v236
    %v533 = vunpack.c.l.b16 %v237
    %v534 = vunpack.c.l.b16 %v238
    %v535 = vunpack.c.l.b16 %v239
    %v536 = vunpack.c.l.b16 %v240
    %v537 = vunpack.c.l.b16 %v241
    %v538 = vunpack.c.l.b16 %v242
    %v539 = vunpack.c.l.b16 %v243
    %v540 = vunpack.c.l.b16 %v244
    %v541 = vunpack.c.l.b16 %v245
    %v542 = vunpack.c.l.b16 %v246
    %v543 = vunpack.c.l.b16 %v247
    %v544 = vunpack.c.l.b16 %v248
    %v545 = vunpack.c.l.b16 %v249
    %v546 = vunpack.c.l.b16 %v250
    %v547 = vunpack.c.l.b16 %v251
    %v548 = vunpack.c.l.b16 %v252
    %v549 = vpack.c.b16 %v422, %v421
    %v550 = vpack.c.b16 %v424, %v423
    %v551 = vpack.c.b16 %v426, %v425
    %v552 = vpack.c.b16 %v428, %v427
    %v553 = vpack.c.b16 %v430, %v429
    %v554 = vpack.c.b16 %v432, %v431
    %v555 = vpack.c.b16 %v434, %v433
    %v556 = vpack.c.b16 %v436, %v435
    %v557 = vpack.c.b16 %v438, %v437
    %v558 = vpack.c.b16 %v440, %v439
    %v559 = vpack.c.b16 %v442, %v441
    %v560 = vpack.c.b16 %v444, %v443
    %v561 = vpack.c.b16 %v446, %v445
    %v562 = vpack.c.b16 %v448, %v447
    %v563 = vpack.c.b16 %v450, %v449
    %v564 = vpack.c.b16 %v452, %v451
    %v565 = vpack.c.b16 %v454, %v453
    %v566 = vpack.c.b16 %v456, %v455
    %v567 = vpack.c.b16 %v458, %v457
    %v568 = vpack.c.b16 %v460, %v459
    %v569 = vpack.c.b16 %v462, %v461
    %v570 = vpack.c.b16 %v464, %v463
    %v571 = vpack.c.b16 %v466, %v465
    %v572 = vpack.c.b16 %v468, %v467
    %v573 = vpack.c.b16 %v470, %v469
    %v574 = vpack.c.b16 %v472, %v471
    %v575 = vpack.c.b16 %v474, %v473
    %v576 = vpack.c.b16 %v476, %v475
    %v577 = vpack.c.b16 %v478, %v477
    %v578 = vpack.c.b16 %v480, %v479
    %v579 = vpack.c.b16 %v482, %v481
    %v580 = vpack.c.b16 %v484, %v483
    %v581 = vpack.c.b16 %v486, %v485
    %v582 = vpack.c.b16 %v488, %v487
    %v583 = vpack.c.b16 %v490, %v489
    %v584 = vpack.c.b16 %v492, %v491
    %v585 = vpack.c.b16 %v494, %v493
    %v586 = vpack.c.b16 %v496, %v495
    %v587 = vpack.c.b16 %v498, %v497
    %v588 = vpack.c.b16 %v500, %v499
    %v589 = vpack.c.b16 %v502, %v501
    %v590 = vpack.c.b16 %v504, %v503
    %v591 = vpack.c.b16 %v506, %v505
    %v592 = vpack.c.b16 %v508, %v507
    %v593 = vpack.c.b16 %v510, %v509
    %v594 = vpack.c.b16 %v512, %v511
    %v595 = vpack.c.b16 %v514, %v513
    %v596 = vpack.c.b16 %v516, %v515
    %v597 = vpack.c.b16 %v518, %v517
    %v598 = vpack.c.b16 %v520, %v519
    %v599 = vpack.c.b16 %v522, %v521
    %v600 = vpack.c.b16 %v524, %v523
    %v601 = vpack.c.b16 %v526, %v525
    %v602 = vpack.c.b16 %v528, %v527
    %v603 = vpack.c.b16 %v530, %v529
    %v604 = vpack.c.b16 %v532, %v531
    %v605 = vpack.c.b16 %v534, %v533
    %v606 = vpack.c.b16 %v536, %v535
    %v607 = vpack.c.b16 %v538, %v537
    %v608 = vpack.c.b16 %v540, %v539
    %v609 = vpack.c.b16 %v542, %v541
    %v610 = vpack.c.b16 %v544, %v543
    %v611 = vpack.c.b16 %v546, %v545
    %v612 = vpack.c.b16 %v548, %v547
    %677 = vmatprep.subr.bf16.mxu0 0
    %678 = vmatpush1.bf16.msra.mxu0 %v556
    %679 = vmatprep.subr.bf16.mxu0 0
    %680 = vmatpush1.bf16.msra.mxu0 %v555
    %681 = vmatprep.subr.bf16.mxu0 0
    %682 = vmatpush1.bf16.msra.mxu0 %v554
    %683 = vmatprep.subr.bf16.mxu0 0
    %684 = vmatpush1.bf16.msra.mxu0 %v553
    %685 = vmatprep.subr.bf16.mxu0 0
    %686 = vmatpush1.bf16.msra.mxu0 %v552
    %687 = vmatprep.subr.bf16.mxu0 0
    %688 = vmatpush1.bf16.msra.mxu0 %v551
    %689 = vmatprep.subr.bf16.mxu0 0
    %690 = vmatpush1.bf16.msra.mxu0 %v550
    %691 = vmatprep.subr.bf16.mxu0 0
    %692 = vmatpush1.bf16.msra.mxu0 %v549
    %693 = vmatprep.subr.bf16.mxu0 0
    %694 = vmatpush2.bf16.msra.mxu0 %v564
    %695 = vmatprep.subr.bf16.mxu0 0
    %696 = vmatpush2.bf16.msra.mxu0 %v563
    %697 = vmatprep.subr.bf16.mxu0 0
    %698 = vmatpush2.bf16.msra.mxu0 %v562
    %699 = vmatprep.subr.bf16.mxu0 0
    %700 = vmatpush2.bf16.msra.mxu0 %v561
    %701 = vmatprep.subr.bf16.mxu0 0
    %702 = vmatpush2.bf16.msra.mxu0 %v560
    %703 = vmatprep.subr.bf16.mxu0 0
    %704 = vmatpush2.bf16.msra.mxu0 %v559
    %705 = vmatprep.subr.bf16.mxu0 0
    %706 = vmatpush2.bf16.msra.mxu0 %v558
    %707 = vmatprep.subr.bf16.mxu0 0
    %708 = vmatpush2.bf16.msra.mxu0 %v557
    %709 = vmatprep.mubr.bf16.mxu0 %v278
    %710 = vmatmul.mubr.bf16.gmra.mxu0 %v277
    %v711 = vpop.f32.mrf.mxu0
    %v712 = vadd.f32 0.0, %v711
    %v713 = vpop.f32.mrf.mxu0
    %v714 = vpop.f32.mrf.mxu0
    %v715 = vadd.f32 0.0, %v714
    %v716 = vpop.f32.mrf.mxu0
    %717 = vdwg.mxu0
    %718 = vmatprep.subr.bf16.mxu0 0
    %719 = vmatpush1.bf16.msra.mxu0 %v572
    %720 = vmatprep.subr.bf16.mxu0 0
    %721 = vmatpush1.bf16.msra.mxu0 %v571
    %722 = vmatprep.subr.bf16.mxu0 0
    %723 = vmatpush1.bf16.msra.mxu0 %v570
    %724 = vmatprep.subr.bf16.mxu0 0
    %725 = vmatpush1.bf16.msra.mxu0 %v569
    %726 = vmatprep.subr.bf16.mxu0 0
    %727 = vmatpush1.bf16.msra.mxu0 %v568
    %728 = vmatprep.subr.bf16.mxu0 0
    %729 = vmatpush1.bf16.msra.mxu0 %v567
    %730 = vmatprep.subr.bf16.mxu0 0
    %731 = vmatpush1.bf16.msra.mxu0 %v566
    %732 = vmatprep.subr.bf16.mxu0 0
    %733 = vmatpush1.bf16.msra.mxu0 %v565
    %734 = vmatprep.subr.bf16.mxu0 0
    %735 = vmatpush2.bf16.msra.mxu0 %v580
    %736 = vmatprep.subr.bf16.mxu0 0
    %737 = vmatpush2.bf16.msra.mxu0 %v579
    %738 = vmatprep.subr.bf16.mxu0 0
    %739 = vmatpush2.bf16.msra.mxu0 %v578
    %740 = vmatprep.subr.bf16.mxu0 0
    %741 = vmatpush2.bf16.msra.mxu0 %v577
    %742 = vmatprep.subr.bf16.mxu0 0
    %743 = vmatpush2.bf16.msra.mxu0 %v576
    %744 = vmatprep.subr.bf16.mxu0 0
    %745 = vmatpush2.bf16.msra.mxu0 %v575
    %746 = vmatprep.subr.bf16.mxu0 0
    %747 = vmatpush2.bf16.msra.mxu0 %v574
    %748 = vmatprep.subr.bf16.mxu0 0
    %749 = vmatpush2.bf16.msra.mxu0 %v573
    %750 = vmatprep.mubr.bf16.mxu0 %v280
    %751 = vmatmul.mubr.bf16.gmra.mxu0 %v279
    %v752 = vpop.f32.mrf.mxu0
    %v753 = vadd.f32 %v712, %v752
    %v754 = vpop.f32.mrf.mxu0
    %v755 = vpop.f32.mrf.mxu0
    %v756 = vadd.f32 %v715, %v755
    %v757 = vpop.f32.mrf.mxu0
    %758 = vdwg.mxu0
    %759 = vmatprep.subr.bf16.mxu0 0
    %760 = vmatpush1.bf16.msra.mxu0 %v588
    %761 = vmatprep.subr.bf16.mxu0 0
    %762 = vmatpush1.bf16.msra.mxu0 %v587
    %763 = vmatprep.subr.bf16.mxu0 0
    %764 = vmatpush1.bf16.msra.mxu0 %v586
    %765 = vmatprep.subr.bf16.mxu0 0
    %766 = vmatpush1.bf16.msra.mxu0 %v585
    %767 = vmatprep.subr.bf16.mxu0 0
    %768 = vmatpush1.bf16.msra.mxu0 %v584
    %769 = vmatprep.subr.bf16.mxu0 0
    %770 = vmatpush1.bf16.msra.mxu0 %v583
    %771 = vmatprep.subr.bf16.mxu0 0
    %772 = vmatpush1.bf16.msra.mxu0 %v582
    %773 = vmatprep.subr.bf16.mxu0 0
    %774 = vmatpush1.bf16.msra.mxu0 %v581
    %775 = vmatprep.subr.bf16.mxu0 0
    %776 = vmatpush2.bf16.msra.mxu0 %v596
    %777 = vmatprep.subr.bf16.mxu0 0
    %778 = vmatpush2.bf16.msra.mxu0 %v595
    %779 = vmatprep.subr.bf16.mxu0 0
    %780 = vmatpush2.bf16.msra.mxu0 %v594
    %781 = vmatprep.subr.bf16.mxu0 0
    %782 = vmatpush2.bf16.msra.mxu0 %v593
    %783 = vmatprep.subr.bf16.mxu0 0
    %784 = vmatpush2.bf16.msra.mxu0 %v592
    %785 = vmatprep.subr.bf16.mxu0 0
    %786 = vmatpush2.bf16.msra.mxu0 %v591
    %787 = vmatprep.subr.bf16.mxu0 0
    %788 = vmatpush2.bf16.msra.mxu0 %v590
    %789 = vmatprep.subr.bf16.mxu0 0
    %790 = vmatpush2.bf16.msra.mxu0 %v589
    %791 = vmatprep.mubr.bf16.mxu0 %v282
    %792 = vmatmul.mubr.bf16.gmra.mxu0 %v281
    %v793 = vpop.f32.mrf.mxu0
    %v794 = vadd.f32 %v753, %v793
    %v795 = vpop.f32.mrf.mxu0
    %v796 = vpop.f32.mrf.mxu0
    %v797 = vadd.f32 %v756, %v796
    %v798 = vpop.f32.mrf.mxu0
    %799 = vdwg.mxu0
    %800 = vmatprep.subr.bf16.mxu0 0
    %801 = vmatpush1.bf16.msra.mxu0 %v604
    %802 = vmatprep.subr.bf16.mxu0 0
    %803 = vmatpush1.bf16.msra.mxu0 %v603
    %804 = vmatprep.subr.bf16.mxu0 0
    %805 = vmatpush1.bf16.msra.mxu0 %v602
    %806 = vmatprep.subr.bf16.mxu0 0
    %807 = vmatpush1.bf16.msra.mxu0 %v601
    %808 = vmatprep.subr.bf16.mxu0 0
    %809 = vmatpush1.bf16.msra.mxu0 %v600
    %810 = vmatprep.subr.bf16.mxu0 0
    %811 = vmatpush1.bf16.msra.mxu0 %v599
    %812 = vmatprep.subr.bf16.mxu0 0
    %813 = vmatpush1.bf16.msra.mxu0 %v598
    %814 = vmatprep.subr.bf16.mxu0 0
    %815 = vmatpush1.bf16.msra.mxu0 %v597
    %816 = vmatprep.subr.bf16.mxu0 0
    %817 = vmatpush2.bf16.msra.mxu0 %v612
    %818 = vmatprep.subr.bf16.mxu0 0
    %819 = vmatpush2.bf16.msra.mxu0 %v611
    %820 = vmatprep.subr.bf16.mxu0 0
    %821 = vmatpush2.bf16.msra.mxu0 %v610
    %822 = vmatprep.subr.bf16.mxu0 0
    %823 = vmatpush2.bf16.msra.mxu0 %v609
    %824 = vmatprep.subr.bf16.mxu0 0
    %825 = vmatpush2.bf16.msra.mxu0 %v608
    %826 = vmatprep.subr.bf16.mxu0 0
    %827 = vmatpush2.bf16.msra.mxu0 %v607
    %828 = vmatprep.subr.bf16.mxu0 0
    %829 = vmatpush2.bf16.msra.mxu0 %v606
    %830 = vmatprep.subr.bf16.mxu0 0
    %831 = vmatpush2.bf16.msra.mxu0 %v605
    %832 = vmatprep.mubr.bf16.mxu0 %v284
    %833 = vmatmul.mubr.bf16.gmra.mxu0 %v283
    %v834 = vpop.f32.mrf.mxu0
    %v835 = vadd.f32 %v794, %v834
    %v836 = vpop.f32.mrf.mxu0
    %v837 = vpop.f32.mrf.mxu0
    %v838 = vadd.f32 %v797, %v837
    %v839 = vpop.f32.mrf.mxu0
    %840 = vdwg.mxu0
    %v841 = vadd.f32 %v115, %v835
    %v842 = vadd.f32 %v116, %v838
    %843 = vst [vmem:[#allocation2] sm:$0xff] %v841
    %844 = vst [vmem:[#allocation2 + $0x8] sm:$0xff] %v842
    // Predicated region
    $region62: #{tpu_custom_call.1} parent=1 // pred_check
      %p845 = pneg %p102
    $region63: #{tpu_custom_call.1} parent=1 // pred_check_branch
      %847 = sbr.rel (%p845) target = $region65
    $region64: #{tpu_custom_call.1} parent=1 // pred_region
      %v848 = vld [vmem:[#allocation2] sm:$0xff]
      %v849 = vld [vmem:[#allocation2 + $0x8] sm:$0xff]
      %v850 = vpack.c.bf16 %v849, %v848
      %v851 = vld [vmem:[#allocation8] sm:$0xf]
      %v852 = vld [vmem:[#allocation8 + $0x4] sm:$0xf]
      %v853 = vld [vmem:[#allocation8 + $0x8] sm:$0xf]
      %v854 = vld [vmem:[#allocation8 + $0xc] sm:$0xf]
      %v855 = vld [vmem:[#allocation8 + $0x10] sm:$0xf]
      %v856 = vld [vmem:[#allocation8 + $0x14] sm:$0xf]
      %v857 = vld [vmem:[#allocation8 + $0x18] sm:$0xf]
      %v858 = vld [vmem:[#allocation8 + $0x1c] sm:$0xf]
      %v859 = vld [vmem:[#allocation8 + $0x20] sm:$0xf]
      %v860 = vld [vmem:[#allocation8 + $0x24] sm:$0xf]
      %v861 = vld [vmem:[#allocation8 + $0x28] sm:$0xf]
      %v862 = vld [vmem:[#allocation8 + $0x2c] sm:$0xf]
      %v863 = vld [vmem:[#allocation8 + $0x30] sm:$0xf]
      %v864 = vld [vmem:[#allocation8 + $0x34] sm:$0xf]
      %v865 = vld [vmem:[#allocation8 + $0x38] sm:$0xf]
      %v866 = vld [vmem:[#allocation8 + $0x3c] sm:$0xf]
      %v867 = vld [vmem:[%s4] sm:$0x1]
      %v869 = vlaneseq
      %v870 = vshrl.u32 %v869, 7
      %v871 = vsub.s32 0, %v870
      %v872 = vrot.slane %v867, %v871
      %v890 = vunpack.c.l.b16 %v851
      %v891 = vunpack.c.l.b16 %v852
      %v892 = vunpack.c.l.b16 %v853
      %v893 = vunpack.c.l.b16 %v854
      %v894 = vunpack.c.l.b16 %v855
      %v895 = vunpack.c.l.b16 %v856
      %v896 = vunpack.c.l.b16 %v857
      %v897 = vunpack.c.l.b16 %v858
      %v898 = vunpack.c.l.b16 %v859
      %v899 = vunpack.c.l.b16 %v860
      %v900 = vunpack.c.l.b16 %v861
      %v901 = vunpack.c.l.b16 %v862
      %v902 = vunpack.c.l.b16 %v863
      %v903 = vunpack.c.l.b16 %v864
      %v904 = vunpack.c.l.b16 %v865
      %v905 = vunpack.c.l.b16 %v866
      %v906 = vpack.c.b16 %v891, %v890
      %v907 = vpack.c.b16 %v893, %v892
      %v908 = vpack.c.b16 %v895, %v894
      %v909 = vpack.c.b16 %v897, %v896
      %v910 = vpack.c.b16 %v899, %v898
      %v911 = vpack.c.b16 %v901, %v900
      %v912 = vpack.c.b16 %v903, %v902
      %v913 = vpack.c.b16 %v905, %v904
      %922 = vmatprep.subr.bf16.mxu0 0
      %923 = vmatpush1.bf16.msra.mxu0 %v913
      %924 = vmatprep.subr.bf16.mxu0 0
      %925 = vmatpush1.bf16.msra.mxu0 %v912
      %926 = vmatprep.subr.bf16.mxu0 0
      %927 = vmatpush1.bf16.msra.mxu0 %v911
      %928 = vmatprep.subr.bf16.mxu0 0
      %929 = vmatpush1.bf16.msra.mxu0 %v910
      %930 = vmatprep.subr.bf16.mxu0 0
      %931 = vmatpush1.bf16.msra.mxu0 %v909
      %932 = vmatprep.subr.bf16.mxu0 0
      %933 = vmatpush1.bf16.msra.mxu0 %v908
      %934 = vmatprep.subr.bf16.mxu0 0
      %935 = vmatpush1.bf16.msra.mxu0 %v907
      %936 = vmatprep.subr.bf16.mxu0 0
      %937 = vmatpush1.bf16.msra.mxu0 %v906
      %938 = vmatprep.subr.bf16.mxu0 0
      %939 = vmatpush2.bf16.msra.mxu0 0
      %940 = vmatprep.subr.bf16.mxu0 0
      %941 = vmatpush2.bf16.msra.mxu0 0
      %942 = vmatprep.subr.bf16.mxu0 0
      %943 = vmatpush2.bf16.msra.mxu0 0
      %944 = vmatprep.subr.bf16.mxu0 0
      %945 = vmatpush2.bf16.msra.mxu0 0
      %946 = vmatprep.subr.bf16.mxu0 0
      %947 = vmatpush2.bf16.msra.mxu0 0
      %948 = vmatprep.subr.bf16.mxu0 0
      %949 = vmatpush2.bf16.msra.mxu0 0
      %950 = vmatprep.subr.bf16.mxu0 0
      %951 = vmatpush2.bf16.msra.mxu0 0
      %952 = vmatprep.subr.bf16.mxu0 0
      %953 = vmatpush2.bf16.msra.mxu0 0
      %954 = vmatprep.mubr.bf16.mxu0 0
      %955 = vmatmul.mubr.bf16.gmra.mxu0 %v850
      %v956 = vpop.f32.mrf.mxu0
      %v957 = vadd.f32 %v872, %v956
      %v958 = vpop.f32.mrf.mxu0
      %v959 = vpop.f32.mrf.mxu0
      %v960 = vadd.f32 %v872, %v959
      %v961 = vpop.f32.mrf.mxu0
      %962 = vdwg.mxu0
      %v963 = vpack.c.bf16 %v960, %v957
      %v964 = vld [vmem:[#allocation9] sm:$0xf]
      %v965 = vld [vmem:[#allocation9 + $0x4] sm:$0xf]
      %v966 = vld [vmem:[#allocation9 + $0x8] sm:$0xf]
      %v967 = vld [vmem:[#allocation9 + $0xc] sm:$0xf]
      %v968 = vld [vmem:[#allocation9 + $0x10] sm:$0xf]
      %v969 = vld [vmem:[#allocation9 + $0x14] sm:$0xf]
      %v970 = vld [vmem:[#allocation9 + $0x18] sm:$0xf]
      %v971 = vld [vmem:[#allocation9 + $0x1c] sm:$0xf]
      %v972 = vld [vmem:[#allocation9 + $0x20] sm:$0xf]
      %v973 = vld [vmem:[#allocation9 + $0x24] sm:$0xf]
      %v974 = vld [vmem:[#allocation9 + $0x28] sm:$0xf]
      %v975 = vld [vmem:[#allocation9 + $0x2c] sm:$0xf]
      %v976 = vld [vmem:[#allocation9 + $0x30] sm:$0xf]
      %v977 = vld [vmem:[#allocation9 + $0x34] sm:$0xf]
      %v978 = vld [vmem:[#allocation9 + $0x38] sm:$0xf]
      %v979 = vld [vmem:[#allocation9 + $0x3c] sm:$0xf]
      %v980 = vld [vmem:[%s6] sm:$0x1]
      %v982 = vlaneseq
      %v983 = vshrl.u32 %v982, 7
      %v984 = vsub.s32 0, %v983
      %v985 = vrot.slane %v980, %v984
      %v1003 = vunpack.c.l.b16 %v964
      %v1004 = vunpack.c.l.b16 %v965
      %v1005 = vunpack.c.l.b16 %v966
      %v1006 = vunpack.c.l.b16 %v967
      %v1007 = vunpack.c.l.b16 %v968
      %v1008 = vunpack.c.l.b16 %v969
      %v1009 = vunpack.c.l.b16 %v970
      %v1010 = vunpack.c.l.b16 %v971
      %v1011 = vunpack.c.l.b16 %v972
      %v1012 = vunpack.c.l.b16 %v973
      %v1013 = vunpack.c.l.b16 %v974
      %v1014 = vunpack.c.l.b16 %v975
      %v1015 = vunpack.c.l.b16 %v976
      %v1016 = vunpack.c.l.b16 %v977
      %v1017 = vunpack.c.l.b16 %v978
      %v1018 = vunpack.c.l.b16 %v979
      %v1019 = vpack.c.b16 %v1004, %v1003
      %v1020 = vpack.c.b16 %v1006, %v1005
      %v1021 = vpack.c.b16 %v1008, %v1007
      %v1022 = vpack.c.b16 %v1010, %v1009
      %v1023 = vpack.c.b16 %v1012, %v1011
      %v1024 = vpack.c.b16 %v1014, %v1013
      %v1025 = vpack.c.b16 %v1016, %v1015
      %v1026 = vpack.c.b16 %v1018, %v1017
      %1035 = vmatprep.subr.bf16.mxu0 0
      %1036 = vmatpush1.bf16.msra.mxu0 %v1026
      %1037 = vmatprep.subr.bf16.mxu0 0
      %1038 = vmatpush1.bf16.msra.mxu0 %v1025
      %1039 = vmatprep.subr.bf16.mxu0 0
      %1040 = vmatpush1.bf16.msra.mxu0 %v1024
      %1041 = vmatprep.subr.bf16.mxu0 0
      %1042 = vmatpush1.bf16.msra.mxu0 %v1023
      %1043 = vmatprep.subr.bf16.mxu0 0
      %1044 = vmatpush1.bf16.msra.mxu0 %v1022
      %1045 = vmatprep.subr.bf16.mxu0 0
      %1046 = vmatpush1.bf16.msra.mxu0 %v1021
      %1047 = vmatprep.subr.bf16.mxu0 0
      %1048 = vmatpush1.bf16.msra.mxu0 %v1020
      %1049 = vmatprep.subr.bf16.mxu0 0
      %1050 = vmatpush1.bf16.msra.mxu0 %v1019
      %1051 = vmatprep.subr.bf16.mxu0 0
      %1052 = vmatpush2.bf16.msra.mxu0 0
      %1053 = vmatprep.subr.bf16.mxu0 0
      %1054 = vmatpush2.bf16.msra.mxu0 0
      %1055 = vmatprep.subr.bf16.mxu0 0
      %1056 = vmatpush2.bf16.msra.mxu0 0
      %1057 = vmatprep.subr.bf16.mxu0 0
      %1058 = vmatpush2.bf16.msra.mxu0 0
      %1059 = vmatprep.subr.bf16.mxu0 0
      %1060 = vmatpush2.bf16.msra.mxu0 0
      %1061 = vmatprep.subr.bf16.mxu0 0
      %1062 = vmatpush2.bf16.msra.mxu0 0
      %1063 = vmatprep.subr.bf16.mxu0 0
      %1064 = vmatpush2.bf16.msra.mxu0 0
      %1065 = vmatprep.subr.bf16.mxu0 0
      %1066 = vmatpush2.bf16.msra.mxu0 0
      %1067 = vmatprep.mubr.bf16.mxu0 0
      %1068 = vmatmul.mubr.bf16.gmra.mxu0 %v963
      %v1069 = vpop.f32.mrf.mxu0
      %v1070 = vadd.f32 %v985, %v1069
      %v1071 = vpop.f32.mrf.mxu0
      %v1072 = vpop.f32.mrf.mxu0
      %v1073 = vadd.f32 %v985, %v1072
      %v1074 = vpop.f32.mrf.mxu0
      %1075 = vdwg.mxu0
      %v1076 = vpack.c.bf16 %v1073, %v1070
      %v1077 = vld [vmem:[#allocation11] sm:$0xf]
      %v1078 = vld [vmem:[#allocation11 + $0x4] sm:$0xf]
      %v1079 = vld [vmem:[#allocation11 + $0x8] sm:$0xf]
      %v1080 = vld [vmem:[#allocation11 + $0xc] sm:$0xf]
      %v1081 = vld [vmem:[#allocation11 + $0x10] sm:$0xf]
      %v1082 = vld [vmem:[#allocation11 + $0x14] sm:$0xf]
      %v1083 = vld [vmem:[#allocation11 + $0x18] sm:$0xf]
      %v1084 = vld [vmem:[#allocation11 + $0x1c] sm:$0xf]
      %v1085 = vld [vmem:[#allocation11 + $0x20] sm:$0xf]
      %v1086 = vld [vmem:[#allocation11 + $0x24] sm:$0xf]
      %v1087 = vld [vmem:[#allocation11 + $0x28] sm:$0xf]
      %v1088 = vld [vmem:[#allocation11 + $0x2c] sm:$0xf]
      %v1089 = vld [vmem:[#allocation11 + $0x30] sm:$0xf]
      %v1090 = vld [vmem:[#allocation11 + $0x34] sm:$0xf]
      %v1091 = vld [vmem:[#allocation11 + $0x38] sm:$0xf]
      %v1092 = vld [vmem:[#allocation11 + $0x3c] sm:$0xf]
      %v1093 = vld [vmem:[%s8] sm:$0x1]
      %v1095 = vlaneseq
      %v1096 = vshrl.u32 %v1095, 7
      %v1097 = vsub.s32 0, %v1096
      %v1098 = vrot.slane %v1093, %v1097
      %v1116 = vunpack.c.l.b16 %v1077
      %v1117 = vunpack.c.l.b16 %v1078
      %v1118 = vunpack.c.l.b16 %v1079
      %v1119 = vunpack.c.l.b16 %v1080
      %v1120 = vunpack.c.l.b16 %v1081
      %v1121 = vunpack.c.l.b16 %v1082
      %v1122 = vunpack.c.l.b16 %v1083
      %v1123 = vunpack.c.l.b16 %v1084
      %v1124 = vunpack.c.l.b16 %v1085
      %v1125 = vunpack.c.l.b16 %v1086
      %v1126 = vunpack.c.l.b16 %v1087
      %v1127 = vunpack.c.l.b16 %v1088
      %v1128 = vunpack.c.l.b16 %v1089
      %v1129 = vunpack.c.l.b16 %v1090
      %v1130 = vunpack.c.l.b16 %v1091
      %v1131 = vunpack.c.l.b16 %v1092
      %v1132 = vpack.c.b16 %v1117, %v1116
      %v1133 = vpack.c.b16 %v1119, %v1118
      %v1134 = vpack.c.b16 %v1121, %v1120
      %v1135 = vpack.c.b16 %v1123, %v1122
      %v1136 = vpack.c.b16 %v1125, %v1124
      %v1137 = vpack.c.b16 %v1127, %v1126
      %v1138 = vpack.c.b16 %v1129, %v1128
      %v1139 = vpack.c.b16 %v1131, %v1130
      %1148 = vmatprep.subr.bf16.mxu0 0
      %1149 = vmatpush1.bf16.msra.mxu0 %v1139
      %1150 = vmatprep.subr.bf16.mxu0 0
      %1151 = vmatpush1.bf16.msra.mxu0 %v1138
      %1152 = vmatprep.subr.bf16.mxu0 0
      %1153 = vmatpush1.bf16.msra.mxu0 %v1137
      %1154 = vmatprep.subr.bf16.mxu0 0
      %1155 = vmatpush1.bf16.msra.mxu0 %v1136
      %1156 = vmatprep.subr.bf16.mxu0 0
      %1157 = vmatpush1.bf16.msra.mxu0 %v1135
      %1158 = vmatprep.subr.bf16.mxu0 0
      %1159 = vmatpush1.bf16.msra.mxu0 %v1134
      %1160 = vmatprep.subr.bf16.mxu0 0
      %1161 = vmatpush1.bf16.msra.mxu0 %v1133
      %1162 = vmatprep.subr.bf16.mxu0 0
      %1163 = vmatpush1.bf16.msra.mxu0 %v1132
      %1164 = vmatprep.subr.bf16.mxu0 0
      %1165 = vmatpush2.bf16.msra.mxu0 0
      %1166 = vmatprep.subr.bf16.mxu0 0
      %1167 = vmatpush2.bf16.msra.mxu0 0
      %1168 = vmatprep.subr.bf16.mxu0 0
      %1169 = vmatpush2.bf16.msra.mxu0 0
      %1170 = vmatprep.subr.bf16.mxu0 0
      %1171 = vmatpush2.bf16.msra.mxu0 0
      %1172 = vmatprep.subr.bf16.mxu0 0
      %1173 = vmatpush2.bf16.msra.mxu0 0
      %1174 = vmatprep.subr.bf16.mxu0 0
      %1175 = vmatpush2.bf16.msra.mxu0 0
      %1176 = vmatprep.subr.bf16.mxu0 0
      %1177 = vmatpush2.bf16.msra.mxu0 0
      %1178 = vmatprep.subr.bf16.mxu0 0
      %1179 = vmatpush2.bf16.msra.mxu0 0
      %1180 = vmatprep.mubr.bf16.mxu0 0
      %1181 = vmatmul.mubr.bf16.gmra.mxu0 %v1076
      %v1182 = vpop.f32.mrf.mxu0
      %v1183 = vadd.f32 %v1098, %v1182
      %v1184 = vpop.f32.mrf.mxu0
      %v1185 = vpop.f32.mrf.mxu0
      %v1186 = vadd.f32 %v1098, %v1185
      %v1187 = vpop.f32.mrf.mxu0
      %1188 = vdwg.mxu0
      %1189 = vst [vmem:[#allocation12] sm:$0xff] %v1183
      %1190 = vst [vmem:[#allocation12 + $0x8] sm:$0xff] %v1186
    $region65: #{tpu_custom_call.1} parent=1 // pred_fallthru
      _
    // Predicated region
    $region66: #{tpu_custom_call.1} parent=1 // pred_check
      _
    $region67: #{tpu_custom_call.1} parent=1 // pred_check_branch
      %1192 = sbr.rel (0) target = $region69
    $region68: #{tpu_custom_call.1} parent=1 // pred_region
      %s1194 = ssub.s32 256, 256
      %1195 = vsyncadd [#allocation5], %s1194
      %s1196 = sshll.u32 [#allocation12], 4
      %s1197 = int_to_ptr.vmem [resolvable:$true] %s1196
      %1202 = dma.vmem_to_hbm [thread:$0]  %s1197, 256, %s9, [#allocation5], 128, 128, 8
    $region69: #{tpu_custom_call.1} parent=1 // pred_fallthru
      _
    // Predicated region
    $region70: #{tpu_custom_call.1} parent=1 // pred_check
      _
    $region71: #{tpu_custom_call.1} parent=1 // pred_check_branch
      %1204 = sbr.rel (0) target = $region73
    $region72: #{tpu_custom_call.1} parent=1 // pred_region
      %1205 = dma.done [#allocation5], 256
    $region73: #{tpu_custom_call.1} parent=1 // pred_fallthru
      _
    %1206 = vsyncpa [#allocation4], 1
    %1207 = vsyncpa [#allocation7], 1
    %1208 = vsyncpa [#allocation10], 1
    %1209 = vsyncpa [#allocation5], 1

// kernel: tpu_custom_call.1
$region0: #{tpu_custom_call.1}
  #allocation0 [shape = 'u32[]', space=smem, size = 0x4, offset = 0x4, fixed_abs, tag = 'smem constant byte address 0x4 - core index']
  #allocation1 [shape = 'u32[144,128]{1,0:T(1,128)}', space=vmem, size = 0x12000, scoped, tag = 'internal scratch']
  #allocation2 [shape = 'f32[16,128]{1,0:T(8,128)}', space=vmem, size = 0x2000, scoped, tag = 'scratch operand']
  %s0 = inlined_call_operand.hbm [shape: bf16[16,1024], index: 0, kind: input, shape index: {}]
  %s1 = inlined_call_operand.hbm [shape: bf16[1024,128], index: 1, kind: input, shape index: {}]
  %s2 = inlined_call_operand.vmem [shape: f32[1,128], index: 2, kind: input, shape index: {}]
  %s3 = inlined_call_operand.hbm [shape: bf16[128,128], index: 3, kind: input, shape index: {}]
  %s4 = inlined_call_operand.vmem [shape: f32[1,128], index: 4, kind: input, shape index: {}]
  %s5 = inlined_call_operand.hbm [shape: bf16[128,128], index: 5, kind: input, shape index: {}]
  %s6 = inlined_call_operand.vmem [shape: f32[1,128], index: 6, kind: input, shape index: {}]
  %s7 = inlined_call_operand.hbm [shape: bf16[128,128], index: 7, kind: input, shape index: {}]
  %s8 = inlined_call_operand.vmem [shape: f32[1,128], index: 8, kind: input, shape index: {}]
  %s9 = inlined_call_operand.hbm [shape: f32[16,128], index: 9, kind: output, shape index: {}]
  %s10 = sld [smem:[#allocation0]]
  $region74: #{tpu_custom_call.1} parent=0
    _
  %s12 = ssub.s32 1, %s10
  %s13 = scalar_select 0, %s12, %s10
  $region1: #{tpu_custom_call.1} parent=0
    #allocation3 [shape = 'u8[32768]{0}', space=vmem, size = 0x8000, scoped, tag = 'input window, operand 0, single buffered']
    #allocation4 [shape = 's32[1]{0}', space=sflag, size = 0x4, scoped, tag = 'scoped memory for tpu_custom_call.1']
    #allocation5 [shape = 's32[1]{0}', space=sflag, size = 0x4, scoped, tag = 'scoped memory for tpu_custom_call.1']
    #allocation6 [shape = 'u8[262144]{0}', space=vmem, size = 0x40000, scoped, tag = 'input window, operand 1, single buffered']
    #allocation7 [shape = 's32[1]{0}', space=sflag, size = 0x4, scoped, tag = 'scoped memory for tpu_custom_call.1']
    #allocation8 [shape = 'u8[32768]{0}', space=vmem, size = 0x8000, scoped, tag = 'input window, operand 3, single buffered']
    #allocation9 [shape = 'u8[32768]{0}', space=vmem, size = 0x8000, scoped, tag = 'input window, operand 5, single buffered']
    #allocation10 [shape = 's32[1]{0}', space=sflag, size = 0x4, scoped, tag = 'scoped memory for tpu_custom_call.1']
    #allocation11 [shape = 'u8[32768]{0}', space=vmem, size = 0x8000, scoped, tag = 'input window, operand 7, single buffered']
    #allocation12 [shape = 'u8[8192]{0}', space=vmem, size = 0x2000, scoped, tag = 'output window, operand 0, single buffered']
    %14 = vsyncpa [#allocation4], 0
    %15 = vsyncpa [#allocation7], 0
    %16 = vsyncpa [#allocation10], 0
    %17 = vsyncpa [#allocation5], 0
    // Predicated region
    $region2: #{tpu_custom_call.1} parent=1 // pred_check
      _
    $region3: #{tpu_custom_call.1} parent=1 // pred_check_branch
      %19 = sbr.rel (0) target = $region5
    $region4: #{tpu_custom_call.1} parent=1 // pred_region
      %s21 = ssub.s32 1024, 1024
      %22 = vsyncadd [#allocation4], %s21
      %s23 = sshll.u32 [#allocation3], 4
      %s24 = int_to_ptr.vmem [resolvable:$true] %s23
      %29 = dma.hbm_to_vmem [thread:$0]  %s0, 1024, %s24, [#allocation4], 512, 512, 32
    $region5: #{tpu_custom_call.1} parent=1 // pred_fallthru
      _
    // Predicated region
    $region6: #{tpu_custom_call.1} parent=1 // pred_check
      _
    $region7: #{tpu_custom_call.1} parent=1 // pred_check_branch
      %31 = sbr.rel (0) target = $region9
    $region8: #{tpu_custom_call.1} parent=1 // pred_region
      %s33 = ssub.s32 8192, 8192
      %34 = vsyncadd [#allocation7], %s33
      %s35 = sshll.u32 [#allocation6], 4
      %s36 = int_to_ptr.vmem [resolvable:$true] %s35
      %41 = dma.hbm_to_vmem [thread:$0]  %s1, 8192, %s36, [#allocation7], 64, 64, 4
    $region9: #{tpu_custom_call.1} parent=1 // pred_fallthru
      _
    // Predicated region
    $region10: #{tpu_custom_call.1} parent=1 // pred_check
      _
    $region11: #{tpu_custom_call.1} parent=1 // pred_check_branch
      %43 = sbr.rel (0) target = $region13
    $region12: #{tpu_custom_call.1} parent=1 // pred_region
      _
    $region13: #{tpu_custom_call.1} parent=1 // pred_fallthru
      _
    // Predicated region
    $region14: #{tpu_custom_call.1} parent=1 // pred_check
      _
    $region15: #{tpu_custom_call.1} parent=1 // pred_check_branch
      %45 = sbr.rel (0) target = $region17
    $region16: #{tpu_custom_call.1} parent=1 // pred_region
      %s47 = ssub.s32 1024, 1024
      %48 = vsyncadd [#allocation7], %s47
      %s49 = sshll.u32 [#allocation8], 4
      %s50 = int_to_ptr.vmem [resolvable:$true] %s49
      %55 = dma.hbm_to_vmem [thread:$0]  %s3, 1024, %s50, [#allocation7], 64, 64, 4
    $region17: #{tpu_custom_call.1} parent=1 // pred_fallthru
      _
    // Predicated region
    $region18: #{tpu_custom_call.1} parent=1 // pred_check
      _
    $region19: #{tpu_custom_call.1} parent=1 // pred_check_branch
      %57 = sbr.rel (0) target = $region21
    $region20: #{tpu_custom_call.1} parent=1 // pred_region
      _
    $region21: #{tpu_custom_call.1} parent=1 // pred_fallthru
      _
    // Predicated region
    $region22: #{tpu_custom_call.1} parent=1 // pred_check
      _
    $region23: #{tpu_custom_call.1} parent=1 // pred_check_branch
      %59 = sbr.rel (0) target = $region25
    $region24: #{tpu_custom_call.1} parent=1 // pred_region
      %s61 = ssub.s32 1024, 1024
      %62 = vsyncadd [#allocation10], %s61
      %s63 = sshll.u32 [#allocation9], 4
      %s64 = int_to_ptr.vmem [resolvable:$true] %s63
      %69 = dma.hbm_to_vmem [thread:$0]  %s5, 1024, %s64, [#allocation10], 64, 64, 4
    $region25: #{tpu_custom_call.1} parent=1 // pred_fallthru
      _
    // Predicated region
    $region26: #{tpu_custom_call.1} parent=1 // pred_check
      _
    $region27: #{tpu_custom_call.1} parent=1 // pred_check_branch
      %71 = sbr.rel (0) target = $region29
    $region28: #{tpu_custom_call.1} parent=1 // pred_region
      _
    $region29: #{tpu_custom_call.1} parent=1 // pred_fallthru
      _
    // Predicated region
    $region30: #{tpu_custom_call.1} parent=1 // pred_check
      _
    $region31: #{tpu_custom_call.1} parent=1 // pred_check_branch
      %73 = sbr.rel (0) target = $region33
    $region32: #{tpu_custom_call.1} parent=1 // pred_region
      %s75 = ssub.s32 1024, 1024
      %76 = vsyncadd [#allocation10], %s75
      %s77 = sshll.u32 [#allocation11], 4
      %s78 = int_to_ptr.vmem [resolvable:$true] %s77
      %83 = dma.hbm_to_vmem [thread:$0]  %s7, 1024, %s78, [#allocation10], 64, 64, 4
    $region33: #{tpu_custom_call.1} parent=1 // pred_fallthru
      _
    // Predicated region
    $region34: #{tpu_custom_call.1} parent=1 // pred_check
      _
    $region35: #{tpu_custom_call.1} parent=1 // pred_check_branch
      %85 = sbr.rel (0) target = $region37
    $region36: #{tpu_custom_call.1} parent=1 // pred_region
      _
    $region37: #{tpu_custom_call.1} parent=1 // pred_fallthru
      _
    // Predicated region
    $region38: #{tpu_custom_call.1} parent=1 // pred_check
      _
    $region39: #{tpu_custom_call.1} parent=1 // pred_check_branch
      %87 = sbr.rel (0) target = $region41
    $region40: #{tpu_custom_call.1} parent=1 // pred_region
      %88 = dma.done [#allocation4], 1024
    $region41: #{tpu_custom_call.1} parent=1 // pred_fallthru
      _
    // Predicated region
    $region42: #{tpu_custom_call.1} parent=1 // pred_check
      _
    $region43: #{tpu_custom_call.1} parent=1 // pred_check_branch
      %90 = sbr.rel (0) target = $region45
    $region44: #{tpu_custom_call.1} parent=1 // pred_region
      %91 = dma.done [#allocation7], 8192
    $region45: #{tpu_custom_call.1} parent=1 // pred_fallthru
      _
    // Predicated region
    $region46: #{tpu_custom_call.1} parent=1 // pred_check
      _
    $region47: #{tpu_custom_call.1} parent=1 // pred_check_branch
      %93 = sbr.rel (0) target = $region49
    $region48: #{tpu_custom_call.1} parent=1 // pred_region
      %94 = dma.done [#allocation7], 1024
    $region49: #{tpu_custom_call.1} parent=1 // pred_fallthru
      _
    // Predicated region
    $region50: #{tpu_custom_call.1} parent=1 // pred_check
      _
    $region51: #{tpu_custom_call.1} parent=1 // pred_check_branch
      %96 = sbr.rel (0) target = $region53
    $region52: #{tpu_custom_call.1} parent=1 // pred_region
      %97 = dma.done [#allocation10], 1024
    $region53: #{tpu_custom_call.1} parent=1 // pred_fallthru
      _
    // Predicated region
    $region54: #{tpu_custom_call.1} parent=1 // pred_check
      _
    $region55: #{tpu_custom_call.1} parent=1 // pred_check_branch
      %99 = sbr.rel (0) target = $region57
    $region56: #{tpu_custom_call.1} parent=1 // pred_region
      %100 = dma.done [#allocation10], 1024
    $region57: #{tpu_custom_call.1} parent=1 // pred_fallthru
      _
    %p102 = scmp.eq.s32.totalorder 0, 0
    // Predicated region
    $region58: #{tpu_custom_call.1} parent=1 // pred_check
      %p103 = pneg %p102
    $region59: #{tpu_custom_call.1} parent=1 // pred_check_branch
      %105 = sbr.rel (%p103) target = $region61
    $region60: #{tpu_custom_call.1} parent=1 // pred_region
      %v106 = vld [vmem:[%s2] sm:$0x1]
      %v108 = vlaneseq
      %v109 = vshrl.u32 %v108, 7
      %v110 = vsub.s32 0, %v109
      %v111 = vrot.slane %v106, %v110
      %113 = vst [vmem:[#allocation2] sm:$0xff] %v111
      %114 = vst [vmem:[#allocation2 + $0x8] sm:$0xff] %v111
    $region61: #{tpu_custom_call.1} parent=1 // pred_fallthru
      _
    %v115 = vld [vmem:[#allocation2] sm:$0xff]
    %v116 = vld [vmem:[#allocation2 + $0x8] sm:$0xff]
    %v117 = vld [vmem:[#allocation3] sm:$0xff]
    %v118 = vld [vmem:[#allocation3 + $0x8] sm:$0xff]
    %v119 = vld [vmem:[#allocation3 + $0x10] sm:$0xff]
    %v120 = vld [vmem:[#allocation3 + $0x18] sm:$0xff]
    %v121 = vld [vmem:[#allocation3 + $0x20] sm:$0xff]
    %v122 = vld [vmem:[#allocation3 + $0x28] sm:$0xff]
    %v123 = vld [vmem:[#allocation3 + $0x30] sm:$0xff]
    %v124 = vld [vmem:[#allocation3 + $0x38] sm:$0xff]
    %v125 = vld [vmem:[#allocation6] sm:$0xf]
    %v126 = vld [vmem:[#allocation6 + $0x4] sm:$0xf]
    %v127 = vld [vmem:[#allocation6 + $0x8] sm:$0xf]
    %v128 = vld [vmem:[#allocation6 + $0xc] sm:$0xf]
    %v129 = vld [vmem:[#allocation6 + $0x10] sm:$0xf]
    %v130 = vld [vmem:[#allocation6 + $0x14] sm:$0xf]
    %v131 = vld [vmem:[#allocation6 + $0x18] sm:$0xf]
    %v132 = vld [vmem:[#allocation6 + $0x1c] sm:$0xf]
    %v133 = vld [vmem:[#allocation6 + $0x20] sm:$0xf]
    %v134 = vld [vmem:[#allocation6 + $0x24] sm:$0xf]
    %v135 = vld [vmem:[#allocation6 + $0x28] sm:$0xf]
    %v136 = vld [vmem:[#allocation6 + $0x2c] sm:$0xf]
    %v137 = vld [vmem:[#allocation6 + $0x30] sm:$0xf]
    %v138 = vld [vmem:[#allocation6 + $0x34] sm:$0xf]
    %v139 = vld [vmem:[#allocation6 + $0x38] sm:$0xf]
    %v140 = vld [vmem:[#allocation6 + $0x3c] sm:$0xf]
    %v141 = vld [vmem:[#allocation6 + $0x40] sm:$0xf]
    %v142 = vld [vmem:[#allocation6 + $0x44] sm:$0xf]
    %v143 = vld [vmem:[#allocation6 + $0x48] sm:$0xf]
    %v144 = vld [vmem:[#allocation6 + $0x4c] sm:$0xf]
    %v145 = vld [vmem:[#allocation6 + $0x50] sm:$0xf]
    %v146 = vld [vmem:[#allocation6 + $0x54] sm:$0xf]
    %v147 = vld [vmem:[#allocation6 + $0x58] sm:$0xf]
    %v148 = vld [vmem:[#allocation6 + $0x5c] sm:$0xf]
    %v149 = vld [vmem:[#allocation6 + $0x60] sm:$0xf]
    %v150 = vld [vmem:[#allocation6 + $0x64] sm:$0xf]
    %v151 = vld [vmem:[#allocation6 + $0x68] sm:$0xf]
    %v152 = vld [vmem:[#allocation6 + $0x6c] sm:$0xf]
    %v153 = vld [vmem:[#allocation6 + $0x70] sm:$0xf]
    %v154 = vld [vmem:[#allocation6 + $0x74] sm:$0xf]
    %v155 = vld [vmem:[#allocation6 + $0x78] sm:$0xf]
    %v156 = vld [vmem:[#allocation6 + $0x7c] sm:$0xf]
    %v157 = vld [vmem:[#allocation6 + $0x80] sm:$0xf]
    %v158 = vld [vmem:[#allocation6 + $0x84] sm:$0xf]
    %v159 = vld [vmem:[#allocation6 + $0x88] sm:$0xf]
    %v160 = vld [vmem:[#allocation6 + $0x8c] sm:$0xf]
    %v161 = vld [vmem:[#allocation6 + $0x90] sm:$0xf]
    %v162 = vld [vmem:[#allocation6 + $0x94] sm:$0xf]
    %v163 = vld [vmem:[#allocation6 + $0x98] sm:$0xf]
    %v164 = vld [vmem:[#allocation6 + $0x9c] sm:$0xf]
    %v165 = vld [vmem:[#allocation6 + $0xa0] sm:$0xf]
    %v166 = vld [vmem:[#allocation6 + $0xa4] sm:$0xf]
    %v167 = vld [vmem:[#allocation6 + $0xa8] sm:$0xf]
    %v168 = vld [vmem:[#allocation6 + $0xac] sm:$0xf]
    %v169 = vld [vmem:[#allocation6 + $0xb0] sm:$0xf]
    %v170 = vld [vmem:[#allocation6 + $0xb4] sm:$0xf]
    %v171 = vld [vmem:[#allocation6 + $0xb8] sm:$0xf]
    %v172 = vld [vmem:[#allocation6 + $0xbc] sm:$0xf]
    %v173 = vld [vmem:[#allocation6 + $0xc0] sm:$0xf]
    %v174 = vld [vmem:[#allocation6 + $0xc4] sm:$0xf]
    %v175 = vld [vmem:[#allocation6 + $0xc8] sm:$0xf]
    %v176 = vld [vmem:[#allocation6 + $0xcc] sm:$0xf]
    %v177 = vld [vmem:[#allocation6 + $0xd0] sm:$0xf]
    %v178 = vld [vmem:[#allocation6 + $0xd4] sm:$0xf]
    %v179 = vld [vmem:[#allocation6 + $0xd8] sm:$0xf]
    %v180 = vld [vmem:[#allocation6 + $0xdc] sm:$0xf]
    %v181 = vld [vmem:[#allocation6 + $0xe0] sm:$0xf]
    %v182 = vld [vmem:[#allocation6 + $0xe4] sm:$0xf]
    %v183 = vld [vmem:[#allocation6 + $0xe8] sm:$0xf]
    %v184 = vld [vmem:[#allocation6 + $0xec] sm:$0xf]
    %v185 = vld [vmem:[#allocation6 + $0xf0] sm:$0xf]
    %v186 = vld [vmem:[#allocation6 + $0xf4] sm:$0xf]
    %v187 = vld [vmem:[#allocation6 + $0xf8] sm:$0xf]
    %v188 = vld [vmem:[#allocation6 + $0xfc] sm:$0xf]
    %v189 = vld [vmem:[#allocation6 + $0x100] sm:$0xf]
    %v190 = vld [vmem:[#allocation6 + $0x104] sm:$0xf]
    %v191 = vld [vmem:[#allocation6 + $0x108] sm:$0xf]
    %v192 = vld [vmem:[#allocation6 + $0x10c] sm:$0xf]
    %v193 = vld [vmem:[#allocation6 + $0x110] sm:$0xf]
    %v194 = vld [vmem:[#allocation6 + $0x114] sm:$0xf]
    %v195 = vld [vmem:[#allocation6 + $0x118] sm:$0xf]
    %v196 = vld [vmem:[#allocation6 + $0x11c] sm:$0xf]
    %v197 = vld [vmem:[#allocation6 + $0x120] sm:$0xf]
    %v198 = vld [vmem:[#allocation6 + $0x124] sm:$0xf]
    %v199 = vld [vmem:[#allocation6 + $0x128] sm:$0xf]
    %v200 = vld [vmem:[#allocation6 + $0x12c] sm:$0xf]
    %v201 = vld [vmem:[#allocation6 + $0x130] sm:$0xf]
    %v202 = vld [vmem:[#allocation6 + $0x134] sm:$0xf]
    %v203 = vld [vmem:[#allocation6 + $0x138] sm:$0xf]
    %v204 = vld [vmem:[#allocation6 + $0x13c] sm:$0xf]
    %v205 = vld [vmem:[#allocation6 + $0x140] sm:$0xf]
    %v206 = vld [vmem:[#allocation6 + $0x144] sm:$0xf]
    %v207 = vld [vmem:[#allocation6 + $0x148] sm:$0xf]
    %v208 = vld [vmem:[#allocation6 + $0x14c] sm:$0xf]
    %v209 = vld [vmem:[#allocation6 + $0x150] sm:$0xf]
    %v210 = vld [vmem:[#allocation6 + $0x154] sm:$0xf]
    %v211 = vld [vmem:[#allocation6 + $0x158] sm:$0xf]
    %v212 = vld [vmem:[#allocation6 + $0x15c] sm:$0xf]
    %v213 = vld [vmem:[#allocation6 + $0x160] sm:$0xf]
    %v214 = vld [vmem:[#allocation6 + $0x164] sm:$0xf]
    %v215 = vld [vmem:[#allocation6 + $0x168] sm:$0xf]
    %v216 = vld [vmem:[#allocation6 + $0x16c] sm:$0xf]
    %v217 = vld [vmem:[#allocation6 + $0x170] sm:$0xf]
    %v218 = vld [vmem:[#allocation6 + $0x174] sm:$0xf]
    %v219 = vld [vmem:[#allocation6 + $0x178] sm:$0xf]
    %v220 = vld [vmem:[#allocation6 + $0x17c] sm:$0xf]
    %v221 = vld [vmem:[#allocation6 + $0x180] sm:$0xf]
    %v222 = vld [vmem:[#allocation6 + $0x184] sm:$0xf]
    %v223 = vld [vmem:[#allocation6 + $0x188] sm:$0xf]
    %v224 = vld [vmem:[#allocation6 + $0x18c] sm:$0xf]
    %v225 = vld [vmem:[#allocation6 + $0x190] sm:$0xf]
    %v226 = vld [vmem:[#allocation6 + $0x194] sm:$0xf]
    %v227 = vld [vmem:[#allocation6 + $0x198] sm:$0xf]
    %v228 = vld [vmem:[#allocation6 + $0x19c] sm:$0xf]
    %v229 = vld [vmem:[#allocation6 + $0x1a0] sm:$0xf]
    %v230 = vld [vmem:[#allocation6 + $0x1a4] sm:$0xf]
    %v231 = vld [vmem:[#allocation6 + $0x1a8] sm:$0xf]
    %v232 = vld [vmem:[#allocation6 + $0x1ac] sm:$0xf]
    %v233 = vld [vmem:[#allocation6 + $0x1b0] sm:$0xf]
    %v234 = vld [vmem:[#allocation6 + $0x1b4] sm:$0xf]
    %v235 = vld [vmem:[#allocation6 + $0x1b8] sm:$0xf]
    %v236 = vld [vmem:[#allocation6 + $0x1bc] sm:$0xf]
    %v237 = vld [vmem:[#allocation6 + $0x1c0] sm:$0xf]
    %v238 = vld [vmem:[#allocation6 + $0x1c4] sm:$0xf]
    %v239 = vld [vmem:[#allocation6 + $0x1c8] sm:$0xf]
    %v240 = vld [vmem:[#allocation6 + $0x1cc] sm:$0xf]
    %v241 = vld [vmem:[#allocation6 + $0x1d0] sm:$0xf]
    %v242 = vld [vmem:[#allocation6 + $0x1d4] sm:$0xf]
    %v243 = vld [vmem:[#allocation6 + $0x1d8] sm:$0xf]
    %v244 = vld [vmem:[#allocation6 + $0x1dc] sm:$0xf]
    %v245 = vld [vmem:[#allocation6 + $0x1e0] sm:$0xf]
    %v246 = vld [vmem:[#allocation6 + $0x1e4] sm:$0xf]
    %v247 = vld [vmem:[#allocation6 + $0x1e8] sm:$0xf]
    %v248 = vld [vmem:[#allocation6 + $0x1ec] sm:$0xf]
    %v249 = vld [vmem:[#allocation6 + $0x1f0] sm:$0xf]
    %v250 = vld [vmem:[#allocation6 + $0x1f4] sm:$0xf]
    %v251 = vld [vmem:[#allocation6 + $0x1f8] sm:$0xf]
    %v252 = vld [vmem:[#allocation6 + $0x1fc] sm:$0xf]
    %v261 = vunpack.c.l.b16 %v117
    %v262 = vunpack.c.h.b16 %v117
    %v263 = vunpack.c.l.b16 %v118
    %v264 = vunpack.c.h.b16 %v118
    %v265 = vunpack.c.l.b16 %v119
    %v266 = vunpack.c.h.b16 %v119
    %v267 = vunpack.c.l.b16 %v120
    %v268 = vunpack.c.h.b16 %v120
    %v269 = vunpack.c.l.b16 %v121
    %v270 = vunpack.c.h.b16 %v121
    %v271 = vunpack.c.l.b16 %v122
    %v272 = vunpack.c.h.b16 %v122
    %v273 = vunpack.c.l.b16 %v123
    %v274 = vunpack.c.h.b16 %v123
    %v275 = vunpack.c.l.b16 %v124
    %v276 = vunpack.c.h.b16 %v124
    %v277 = vpack.c.b16 %v269, %v261
    %v278 = vpack.c.b16 %v270, %v262
    %v279 = vpack.c.b16 %v271, %v263
    %v280 = vpack.c.b16 %v272, %v264
    %v281 = vpack.c.b16 %v273, %v265
    %v282 = vpack.c.b16 %v274, %v266
    %v283 = vpack.c.b16 %v275, %v267
    %v284 = vpack.c.b16 %v276, %v268
    %v421 = vunpack.c.l.b16 %v125
    %v422 = vunpack.c.l.b16 %v126
    %v423 = vunpack.c.l.b16 %v127
    %v424 = vunpack.c.l.b16 %v128
    %v425 = vunpack.c.l.b16 %v129
    %v426 = vunpack.c.l.b16 %v130
    %v427 = vunpack.c.l.b16 %v131
    %v428 = vunpack.c.l.b16 %v132
    %v429 = vunpack.c.l.b16 %v133
    %v430 = vunpack.c.l.b16 %v134
    %v431 = vunpack.c.l.b16 %v135
    %v432 = vunpack.c.l.b16 %v136
    %v433 = vunpack.c.l.b16 %v137
    %v434 = vunpack.c.l.b16 %v138
    %v435 = vunpack.c.l.b16 %v139
    %v436 = vunpack.c.l.b16 %v140
    %v437 = vunpack.c.l.b16 %v141
    %v438 = vunpack.c.l.b16 %v142
    %v439 = vunpack.c.l.b16 %v143
    %v440 = vunpack.c.l.b16 %v144
    %v441 = vunpack.c.l.b16 %v145
    %v442 = vunpack.c.l.b16 %v146
    %v443 = vunpack.c.l.b16 %v147
    %v444 = vunpack.c.l.b16 %v148
    %v445 = vunpack.c.l.b16 %v149
    %v446 = vunpack.c.l.b16 %v150
    %v447 = vunpack.c.l.b16 %v151
    %v448 = vunpack.c.l.b16 %v152
    %v449 = vunpack.c.l.b16 %v153
    %v450 = vunpack.c.l.b16 %v154
    %v451 = vunpack.c.l.b16 %v155
    %v452 = vunpack.c.l.b16 %v156
    %v453 = vunpack.c.l.b16 %v157
    %v454 = vunpack.c.l.b16 %v158
    %v455 = vunpack.c.l.b16 %v159
    %v456 = vunpack.c.l.b16 %v160
    %v457 = vunpack.c.l.b16 %v161
    %v458 = vunpack.c.l.b16 %v162
    %v459 = vunpack.c.l.b16 %v163
    %v460 = vunpack.c.l.b16 %v164
    %v461 = vunpack.c.l.b16 %v165
    %v462 = vunpack.c.l.b16 %v166
    %v463 = vunpack.c.l.b16 %v167
    %v464 = vunpack.c.l.b16 %v168
    %v465 = vunpack.c.l.b16 %v169
    %v466 = vunpack.c.l.b16 %v170
    %v467 = vunpack.c.l.b16 %v171
    %v468 = vunpack.c.l.b16 %v172
    %v469 = vunpack.c.l.b16 %v173
    %v470 = vunpack.c.l.b16 %v174
    %v471 = vunpack.c.l.b16 %v175
    %v472 = vunpack.c.l.b16 %v176
    %v473 = vunpack.c.l.b16 %v177
    %v474 = vunpack.c.l.b16 %v178
    %v475 = vunpack.c.l.b16 %v179
    %v476 = vunpack.c.l.b16 %v180
    %v477 = vunpack.c.l.b16 %v181
    %v478 = vunpack.c.l.b16 %v182
    %v479 = vunpack.c.l.b16 %v183
    %v480 = vunpack.c.l.b16 %v184
    %v481 = vunpack.c.l.b16 %v185
    %v482 = vunpack.c.l.b16 %v186
    %v483 = vunpack.c.l.b16 %v187
    %v484 = vunpack.c.l.b16 %v188
    %v485 = vunpack.c.l.b16 %v189
    %v486 = vunpack.c.l.b16 %v190
    %v487 = vunpack.c.l.b16 %v191
    %v488 = vunpack.c.l.b16 %v192
    %v489 = vunpack.c.l.b16 %v193
    %v490 = vunpack.c.l.b16 %v194
    %v491 = vunpack.c.l.b16 %v195
    %v492 = vunpack.c.l.b16 %v196
    %v493 = vunpack.c.l.b16 %v197
    %v494 = vunpack.c.l.b16 %v198
    %v495 = vunpack.c.l.b16 %v199
    %v496 = vunpack.c.l.b16 %v200
    %v497 = vunpack.c.l.b16 %v201
    %v498 = vunpack.c.l.b16 %v202
    %v499 = vunpack.c.l.b16 %v203
    %v500 = vunpack.c.l.b16 %v204
    %v501 = vunpack.c.l.b16 %v205
    %v502 = vunpack.c.l.b16 %v206
    %v503 = vunpack.c.l.b16 %v207
    %v504 = vunpack.c.l.b16 %v208
    %v505 = vunpack.c.l.b16 %v209
    %v506 = vunpack.c.l.b16 %v210
    %v507 = vunpack.c.l.b16 %v211
    %v508 = vunpack.c.l.b16 %v212
    %v509 = vunpack.c.l.b16 %v213
    %v510 = vunpack.c.l.b16 %v214
    %v511 = vunpack.c.l.b16 %v215
    %v512 = vunpack.c.l.b16 %v216
    %v513 = vunpack.c.l.b16 %v217
    %v514 = vunpack.c.l.b16 %v218
    %v515 = vunpack.c.l.b16 %v219
    %v516 = vunpack.c.l.b16 %v220
    %v517 = vunpack.c.l.b16 %v221
    %v518 = vunpack.c.l.b16 %v222
    %v519 = vunpack.c.l.b16 %v223
    %v520 = vunpack.c.l.b16 %v224
    %v521 = vunpack.c.l.b16 %v225
    %v522 = vunpack.c.l.b16 %v226
    %v523 = vunpack.c.l.b16 %v227
    %v524 = vunpack.c.l.b16 %v228
    %v525 = vunpack.c.l.b16 %v229
    %v526 = vunpack.c.l.b16 %v230
    %v527 = vunpack.c.l.b16 %v231
    %v528 = vunpack.c.l.b16 %v232
    %v529 = vunpack.c.l.b16 %v233
    %v530 = vunpack.c.l.b16 %v234
    %v531 = vunpack.c.l.b16 %v235
    %v532 = vunpack.c.l.b16 %v236
    %v533 = vunpack.c.l.b16 %v237
    %v534 = vunpack.c.l.b16 %v238
    %v535 = vunpack.c.l.b16 %v239
    %v536 = vunpack.c.l.b16 %v240
    %v537 = vunpack.c.l.b16 %v241
    %v538 = vunpack.c.l.b16 %v242
    %v539 = vunpack.c.l.b16 %v243
    %v540 = vunpack.c.l.b16 %v244
    %v541 = vunpack.c.l.b16 %v245
    %v542 = vunpack.c.l.b16 %v246
    %v543 = vunpack.c.l.b16 %v247
    %v544 = vunpack.c.l.b16 %v248
    %v545 = vunpack.c.l.b16 %v249
    %v546 = vunpack.c.l.b16 %v250
    %v547 = vunpack.c.l.b16 %v251
    %v548 = vunpack.c.l.b16 %v252
    %v549 = vpack.c.b16 %v422, %v421
    %v550 = vpack.c.b16 %v424, %v423
    %v551 = vpack.c.b16 %v426, %v425
    %v552 = vpack.c.b16 %v428, %v427
    %v553 = vpack.c.b16 %v430, %v429
    %v554 = vpack.c.b16 %v432, %v431
    %v555 = vpack.c.b16 %v434, %v433
    %v556 = vpack.c.b16 %v436, %v435
    %v557 = vpack.c.b16 %v438, %v437
    %v558 = vpack.c.b16 %v440, %v439
    %v559 = vpack.c.b16 %v442, %v441
    %v560 = vpack.c.b16 %v444, %v443
    %v561 = vpack.c.b16 %v446, %v445
    %v562 = vpack.c.b16 %v448, %v447
    %v563 = vpack.c.b16 %v450, %v449
    %v564 = vpack.c.b16 %v452, %v451
    %v565 = vpack.c.b16 %v454, %v453
    %v566 = vpack.c.b16 %v456, %v455
    %v567 = vpack.c.b16 %v458, %v457
    %v568 = vpack.c.b16 %v460, %v459
    %v569 = vpack.c.b16 %v462, %v461
    %v570 = vpack.c.b16 %v464, %v463
    %v571 = vpack.c.b16 %v466, %v465
    %v572 = vpack.c.b16 %v468, %v467
    %v573 = vpack.c.b16 %v470, %v469
    %v574 = vpack.c.b16 %v472, %v471
    %v575 = vpack.c.b16 %v474, %v473
    %v576 = vpack.c.b16 %v476, %v475
    %v577 = vpack.c.b16 %v478, %v477
    %v578 = vpack.c.b16 %v480, %v479
    %v579 = vpack.c.b16 %v482, %v481
    %v580 = vpack.c.b16 %v484, %v483
    %v581 = vpack.c.b16 %v486, %v485
    %v582 = vpack.c.b16 %v488, %v487
    %v583 = vpack.c.b16 %v490, %v489
    %v584 = vpack.c.b16 %v492, %v491
    %v585 = vpack.c.b16 %v494, %v493
    %v586 = vpack.c.b16 %v496, %v495
    %v587 = vpack.c.b16 %v498, %v497
    %v588 = vpack.c.b16 %v500, %v499
    %v589 = vpack.c.b16 %v502, %v501
    %v590 = vpack.c.b16 %v504, %v503
    %v591 = vpack.c.b16 %v506, %v505
    %v592 = vpack.c.b16 %v508, %v507
    %v593 = vpack.c.b16 %v510, %v509
    %v594 = vpack.c.b16 %v512, %v511
    %v595 = vpack.c.b16 %v514, %v513
    %v596 = vpack.c.b16 %v516, %v515
    %v597 = vpack.c.b16 %v518, %v517
    %v598 = vpack.c.b16 %v520, %v519
    %v599 = vpack.c.b16 %v522, %v521
    %v600 = vpack.c.b16 %v524, %v523
    %v601 = vpack.c.b16 %v526, %v525
    %v602 = vpack.c.b16 %v528, %v527
    %v603 = vpack.c.b16 %v530, %v529
    %v604 = vpack.c.b16 %v532, %v531
    %v605 = vpack.c.b16 %v534, %v533
    %v606 = vpack.c.b16 %v536, %v535
    %v607 = vpack.c.b16 %v538, %v537
    %v608 = vpack.c.b16 %v540, %v539
    %v609 = vpack.c.b16 %v542, %v541
    %v610 = vpack.c.b16 %v544, %v543
    %v611 = vpack.c.b16 %v546, %v545
    %v612 = vpack.c.b16 %v548, %v547
    %677 = vmatprep.subr.bf16.mxu0 0
    %678 = vmatpush1.bf16.msra.mxu0 %v556
    %679 = vmatprep.subr.bf16.mxu0 0
    %680 = vmatpush1.bf16.msra.mxu0 %v555
    %681 = vmatprep.subr.bf16.mxu0 0
    %682 = vmatpush1.bf16.msra.mxu0 %v554
    %683 = vmatprep.subr.bf16.mxu0 0
    %684 = vmatpush1.bf16.msra.mxu0 %v553
    %685 = vmatprep.subr.bf16.mxu0 0
    %686 = vmatpush1.bf16.msra.mxu0 %v552
    %687 = vmatprep.subr.bf16.mxu0 0
    %688 = vmatpush1.bf16.msra.mxu0 %v551
    %689 = vmatprep.subr.bf16.mxu0 0
    %690 = vmatpush1.bf16.msra.mxu0 %v550
    %691 = vmatprep.subr.bf16.mxu0 0
    %692 = vmatpush1.bf16.msra.mxu0 %v549
    %693 = vmatprep.subr.bf16.mxu0 0
    %694 = vmatpush2.bf16.msra.mxu0 %v564
    %695 = vmatprep.subr.bf16.mxu0 0
    %696 = vmatpush2.bf16.msra.mxu0 %v563
    %697 = vmatprep.subr.bf16.mxu0 0
    %698 = vmatpush2.bf16.msra.mxu0 %v562
    %699 = vmatprep.subr.bf16.mxu0 0
    %700 = vmatpush2.bf16.msra.mxu0 %v561
    %701 = vmatprep.subr.bf16.mxu0 0
    %702 = vmatpush2.bf16.msra.mxu0 %v560
    %703 = vmatprep.subr.bf16.mxu0 0
    %704 = vmatpush2.bf16.msra.mxu0 %v559
    %705 = vmatprep.subr.bf16.mxu0 0
    %706 = vmatpush2.bf16.msra.mxu0 %v558
    %707 = vmatprep.subr.bf16.mxu0 0
    %708 = vmatpush2.bf16.msra.mxu0 %v557
    %709 = vmatprep.mubr.bf16.mxu0 %v278
    %710 = vmatmul.mubr.bf16.gmra.mxu0 %v277
    %v711 = vpop.f32.mrf.mxu0
    %v712 = vadd.f32 0.0, %v711
    %v713 = vpop.f32.mrf.mxu0
    %v714 = vpop.f32.mrf.mxu0
    %v715 = vadd.f32 0.0, %v714
    %v716 = vpop.f32.mrf.mxu0
    %717 = vdwg.mxu0
    %718 = vmatprep.subr.bf16.mxu0 0
    %719 = vmatpush1.bf16.msra.mxu0 %v572
    %720 = vmatprep.subr.bf16.mxu0 0
    %721 = vmatpush1.bf16.msra.mxu0 %v571
    %722 = vmatprep.subr.bf16.mxu0 0
    %723 = vmatpush1.bf16.msra.mxu0 %v570
    %724 = vmatprep.subr.bf16.mxu0 0
    %725 = vmatpush1.bf16.msra.mxu0 %v569
    %726 = vmatprep.subr.bf16.mxu0 0
    %727 = vmatpush1.bf16.msra.mxu0 %v568
    %728 = vmatprep.subr.bf16.mxu0 0
    %729 = vmatpush1.bf16.msra.mxu0 %v567
    %730 = vmatprep.subr.bf16.mxu0 0
    %731 = vmatpush1.bf16.msra.mxu0 %v566
    %732 = vmatprep.subr.bf16.mxu0 0
    %733 = vmatpush1.bf16.msra.mxu0 %v565
    %734 = vmatprep.subr.bf16.mxu0 0
    %735 = vmatpush2.bf16.msra.mxu0 %v580
    %736 = vmatprep.subr.bf16.mxu0 0
    %737 = vmatpush2.bf16.msra.mxu0 %v579
    %738 = vmatprep.subr.bf16.mxu0 0
    %739 = vmatpush2.bf16.msra.mxu0 %v578
    %740 = vmatprep.subr.bf16.mxu0 0
    %741 = vmatpush2.bf16.msra.mxu0 %v577
    %742 = vmatprep.subr.bf16.mxu0 0
    %743 = vmatpush2.bf16.msra.mxu0 %v576
    %744 = vmatprep.subr.bf16.mxu0 0
    %745 = vmatpush2.bf16.msra.mxu0 %v575
    %746 = vmatprep.subr.bf16.mxu0 0
    %747 = vmatpush2.bf16.msra.mxu0 %v574
    %748 = vmatprep.subr.bf16.mxu0 0
    %749 = vmatpush2.bf16.msra.mxu0 %v573
    %750 = vmatprep.mubr.bf16.mxu0 %v280
    %751 = vmatmul.mubr.bf16.gmra.mxu0 %v279
    %v752 = vpop.f32.mrf.mxu0
    %v753 = vadd.f32 %v712, %v752
    %v754 = vpop.f32.mrf.mxu0
    %v755 = vpop.f32.mrf.mxu0
    %v756 = vadd.f32 %v715, %v755
    %v757 = vpop.f32.mrf.mxu0
    %758 = vdwg.mxu0
    %759 = vmatprep.subr.bf16.mxu0 0
    %760 = vmatpush1.bf16.msra.mxu0 %v588
    %761 = vmatprep.subr.bf16.mxu0 0
    %762 = vmatpush1.bf16.msra.mxu0 %v587
    %763 = vmatprep.subr.bf16.mxu0 0
    %764 = vmatpush1.bf16.msra.mxu0 %v586
    %765 = vmatprep.subr.bf16.mxu0 0
    %766 = vmatpush1.bf16.msra.mxu0 %v585
    %767 = vmatprep.subr.bf16.mxu0 0
    %768 = vmatpush1.bf16.msra.mxu0 %v584
    %769 = vmatprep.subr.bf16.mxu0 0
    %770 = vmatpush1.bf16.msra.mxu0 %v583
    %771 = vmatprep.subr.bf16.mxu0 0
    %772 = vmatpush1.bf16.msra.mxu0 %v582
    %773 = vmatprep.subr.bf16.mxu0 0
    %774 = vmatpush1.bf16.msra.mxu0 %v581
    %775 = vmatprep.subr.bf16.mxu0 0
    %776 = vmatpush2.bf16.msra.mxu0 %v596
    %777 = vmatprep.subr.bf16.mxu0 0
    %778 = vmatpush2.bf16.msra.mxu0 %v595
    %779 = vmatprep.subr.bf16.mxu0 0
    %780 = vmatpush2.bf16.msra.mxu0 %v594
    %781 = vmatprep.subr.bf16.mxu0 0
    %782 = vmatpush2.bf16.msra.mxu0 %v593
    %783 = vmatprep.subr.bf16.mxu0 0
    %784 = vmatpush2.bf16.msra.mxu0 %v592
    %785 = vmatprep.subr.bf16.mxu0 0
    %786 = vmatpush2.bf16.msra.mxu0 %v591
    %787 = vmatprep.subr.bf16.mxu0 0
    %788 = vmatpush2.bf16.msra.mxu0 %v590
    %789 = vmatprep.subr.bf16.mxu0 0
    %790 = vmatpush2.bf16.msra.mxu0 %v589
    %791 = vmatprep.mubr.bf16.mxu0 %v282
    %792 = vmatmul.mubr.bf16.gmra.mxu0 %v281
    %v793 = vpop.f32.mrf.mxu0
    %v794 = vadd.f32 %v753, %v793
    %v795 = vpop.f32.mrf.mxu0
    %v796 = vpop.f32.mrf.mxu0
    %v797 = vadd.f32 %v756, %v796
    %v798 = vpop.f32.mrf.mxu0
    %799 = vdwg.mxu0
    %800 = vmatprep.subr.bf16.mxu0 0
    %801 = vmatpush1.bf16.msra.mxu0 %v604
    %802 = vmatprep.subr.bf16.mxu0 0
    %803 = vmatpush1.bf16.msra.mxu0 %v603
    %804 = vmatprep.subr.bf16.mxu0 0
    %805 = vmatpush1.bf16.msra.mxu0 %v602
    %806 = vmatprep.subr.bf16.mxu0 0
    %807 = vmatpush1.bf16.msra.mxu0 %v601
    %808 = vmatprep.subr.bf16.mxu0 0
    %809 = vmatpush1.bf16.msra.mxu0 %v600
    %810 = vmatprep.subr.bf16.mxu0 0
    %811 = vmatpush1.bf16.msra.mxu0 %v599
    %812 = vmatprep.subr.bf16.mxu0 0
    %813 = vmatpush1.bf16.msra.mxu0 %v598
    %814 = vmatprep.subr.bf16.mxu0 0
    %815 = vmatpush1.bf16.msra.mxu0 %v597
    %816 = vmatprep.subr.bf16.mxu0 0
    %817 = vmatpush2.bf16.msra.mxu0 %v612
    %818 = vmatprep.subr.bf16.mxu0 0
    %819 = vmatpush2.bf16.msra.mxu0 %v611
    %820 = vmatprep.subr.bf16.mxu0 0
    %821 = vmatpush2.bf16.msra.mxu0 %v610
    %822 = vmatprep.subr.bf16.mxu0 0
    %823 = vmatpush2.bf16.msra.mxu0 %v609
    %824 = vmatprep.subr.bf16.mxu0 0
    %825 = vmatpush2.bf16.msra.mxu0 %v608
    %826 = vmatprep.subr.bf16.mxu0 0
    %827 = vmatpush2.bf16.msra.mxu0 %v607
    %828 = vmatprep.subr.bf16.mxu0 0
    %829 = vmatpush2.bf16.msra.mxu0 %v606
    %830 = vmatprep.subr.bf16.mxu0 0
    %831 = vmatpush2.bf16.msra.mxu0 %v605
    %832 = vmatprep.mubr.bf16.mxu0 %v284
    %833 = vmatmul.mubr.bf16.gmra.mxu0 %v283
    %v834 = vpop.f32.mrf.mxu0
    %v835 = vadd.f32 %v794, %v834
    %v836 = vpop.f32.mrf.mxu0
    %v837 = vpop.f32.mrf.mxu0
    %v838 = vadd.f32 %v797, %v837
    %v839 = vpop.f32.mrf.mxu0
    %840 = vdwg.mxu0
    %v841 = vadd.f32 %v115, %v835
    %v842 = vadd.f32 %v116, %v838
    %843 = vst [vmem:[#allocation2] sm:$0xff] %v841
    %844 = vst [vmem:[#allocation2 + $0x8] sm:$0xff] %v842
    // Predicated region
    $region62: #{tpu_custom_call.1} parent=1 // pred_check
      %p845 = pneg %p102
    $region63: #{tpu_custom_call.1} parent=1 // pred_check_branch
      %847 = sbr.rel (%p845) target = $region65
    $region64: #{tpu_custom_call.1} parent=1 // pred_region
      %v848 = vld [vmem:[#allocation2] sm:$0xff]
      %v849 = vld [vmem:[#allocation2 + $0x8] sm:$0xff]
      %v850 = vpack.c.bf16 %v849, %v848
      %v851 = vld [vmem:[#allocation8] sm:$0xf]
      %v852 = vld [vmem:[#allocation8 + $0x4] sm:$0xf]
      %v853 = vld [vmem:[#allocation8 + $0x8] sm:$0xf]
      %v854 = vld [vmem:[#allocation8 + $0xc] sm:$0xf]
      %v855 = vld [vmem:[#allocation8 + $0x10] sm:$0xf]
      %v856 = vld [vmem:[#allocation8 + $0x14] sm:$0xf]
      %v857 = vld [vmem:[#allocation8 + $0x18] sm:$0xf]
      %v858 = vld [vmem:[#allocation8 + $0x1c] sm:$0xf]
      %v859 = vld [vmem:[#allocation8 + $0x20] sm:$0xf]
      %v860 = vld [vmem:[#allocation8 + $0x24] sm:$0xf]
      %v861 = vld [vmem:[#allocation8 + $0x28] sm:$0xf]
      %v862 = vld [vmem:[#allocation8 + $0x2c] sm:$0xf]
      %v863 = vld [vmem:[#allocation8 + $0x30] sm:$0xf]
      %v864 = vld [vmem:[#allocation8 + $0x34] sm:$0xf]
      %v865 = vld [vmem:[#allocation8 + $0x38] sm:$0xf]
      %v866 = vld [vmem:[#allocation8 + $0x3c] sm:$0xf]
      %v867 = vld [vmem:[%s4] sm:$0x1]
      %v869 = vlaneseq
      %v870 = vshrl.u32 %v869, 7
      %v871 = vsub.s32 0, %v870
      %v872 = vrot.slane %v867, %v871
      %v890 = vunpack.c.l.b16 %v851
      %v891 = vunpack.c.l.b16 %v852
      %v892 = vunpack.c.l.b16 %v853
      %v893 = vunpack.c.l.b16 %v854
      %v894 = vunpack.c.l.b16 %v855
      %v895 = vunpack.c.l.b16 %v856
      %v896 = vunpack.c.l.b16 %v857
      %v897 = vunpack.c.l.b16 %v858
      %v898 = vunpack.c.l.b16 %v859
      %v899 = vunpack.c.l.b16 %v860
      %v900 = vunpack.c.l.b16 %v861
      %v901 = vunpack.c.l.b16 %v862
      %v902 = vunpack.c.l.b16 %v863
      %v903 = vunpack.c.l.b16 %v864
      %v904 = vunpack.c.l.b16 %v865
      %v905 = vunpack.c.l.b16 %v866
      %v906 = vpack.c.b16 %v891, %v890
      %v907 = vpack.c.b16 %v893, %v892
      %v908 = vpack.c.b16 %v895, %v894
      %v909 = vpack.c.b16 %v897, %v896
      %v910 = vpack.c.b16 %v899, %v898
      %v911 = vpack.c.b16 %v901, %v900
      %v912 = vpack.c.b16 %v903, %v902
      %v913 = vpack.c.b16 %v905, %v904
      %922 = vmatprep.subr.bf16.mxu0 0
      %923 = vmatpush1.bf16.msra.mxu0 %v913
      %924 = vmatprep.subr.bf16.mxu0 0
      %925 = vmatpush1.bf16.msra.mxu0 %v912
      %926 = vmatprep.subr.bf16.mxu0 0
      %927 = vmatpush1.bf16.msra.mxu0 %v911
      %928 = vmatprep.subr.bf16.mxu0 0
      %929 = vmatpush1.bf16.msra.mxu0 %v910
      %930 = vmatprep.subr.bf16.mxu0 0
      %931 = vmatpush1.bf16.msra.mxu0 %v909
      %932 = vmatprep.subr.bf16.mxu0 0
      %933 = vmatpush1.bf16.msra.mxu0 %v908
      %934 = vmatprep.subr.bf16.mxu0 0
      %935 = vmatpush1.bf16.msra.mxu0 %v907
      %936 = vmatprep.subr.bf16.mxu0 0
      %937 = vmatpush1.bf16.msra.mxu0 %v906
      %938 = vmatprep.subr.bf16.mxu0 0
      %939 = vmatpush2.bf16.msra.mxu0 0
      %940 = vmatprep.subr.bf16.mxu0 0
      %941 = vmatpush2.bf16.msra.mxu0 0
      %942 = vmatprep.subr.bf16.mxu0 0
      %943 = vmatpush2.bf16.msra.mxu0 0
      %944 = vmatprep.subr.bf16.mxu0 0
      %945 = vmatpush2.bf16.msra.mxu0 0
      %946 = vmatprep.subr.bf16.mxu0 0
      %947 = vmatpush2.bf16.msra.mxu0 0
      %948 = vmatprep.subr.bf16.mxu0 0
      %949 = vmatpush2.bf16.msra.mxu0 0
      %950 = vmatprep.subr.bf16.mxu0 0
      %951 = vmatpush2.bf16.msra.mxu0 0
      %952 = vmatprep.subr.bf16.mxu0 0
      %953 = vmatpush2.bf16.msra.mxu0 0
      %954 = vmatprep.mubr.bf16.mxu0 0
      %955 = vmatmul.mubr.bf16.gmra.mxu0 %v850
      %v956 = vpop.f32.mrf.mxu0
      %v957 = vadd.f32 %v872, %v956
      %v958 = vpop.f32.mrf.mxu0
      %v959 = vpop.f32.mrf.mxu0
      %v960 = vadd.f32 %v872, %v959
      %v961 = vpop.f32.mrf.mxu0
      %962 = vdwg.mxu0
      %v963 = vpack.c.bf16 %v960, %v957
      %v964 = vld [vmem:[#allocation9] sm:$0xf]
      %v965 = vld [vmem:[#allocation9 + $0x4] sm:$0xf]
      %v966 = vld [vmem:[#allocation9 + $0x8] sm:$0xf]
      %v967 = vld [vmem:[#allocation9 + $0xc] sm:$0xf]
      %v968 = vld [vmem:[#allocation9 + $0x10] sm:$0xf]
      %v969 = vld [vmem:[#allocation9 + $0x14] sm:$0xf]
      %v970 = vld [vmem:[#allocation9 + $0x18] sm:$0xf]
      %v971 = vld [vmem:[#allocation9 + $0x1c] sm:$0xf]
      %v972 = vld [vmem:[#allocation9 + $0x20] sm:$0xf]
      %v973 = vld [vmem:[#allocation9 + $0x24] sm:$0xf]
      %v974 = vld [vmem:[#allocation9 + $0x28] sm:$0xf]
      %v975 = vld [vmem:[#allocation9 + $0x2c] sm:$0xf]
      %v976 = vld [vmem:[#allocation9 + $0x30] sm:$0xf]
      %v977 = vld [vmem:[#allocation9 + $0x34] sm:$0xf]
      %v978 = vld [vmem:[#allocation9 + $0x38] sm:$0xf]
      %v979 = vld [vmem:[#allocation9 + $0x3c] sm:$0xf]
      %v980 = vld [vmem:[%s6] sm:$0x1]
      %v982 = vlaneseq
      %v983 = vshrl.u32 %v982, 7
      %v984 = vsub.s32 0, %v983
      %v985 = vrot.slane %v980, %v984
      %v1003 = vunpack.c.l.b16 %v964
      %v1004 = vunpack.c.l.b16 %v965
      %v1005 = vunpack.c.l.b16 %v966
      %v1006 = vunpack.c.l.b16 %v967
      %v1007 = vunpack.c.l.b16 %v968
      %v1008 = vunpack.c.l.b16 %v969
      %v1009 = vunpack.c.l.b16 %v970
      %v1010 = vunpack.c.l.b16 %v971
      %v1011 = vunpack.c.l.b16 %v972
      %v1012 = vunpack.c.l.b16 %v973
      %v1013 = vunpack.c.l.b16 %v974
      %v1014 = vunpack.c.l.b16 %v975
      %v1015 = vunpack.c.l.b16 %v976
      %v1016 = vunpack.c.l.b16 %v977
      %v1017 = vunpack.c.l.b16 %v978
      %v1018 = vunpack.c.l.b16 %v979
      %v1019 = vpack.c.b16 %v1004, %v1003
      %v1020 = vpack.c.b16 %v1006, %v1005
      %v1021 = vpack.c.b16 %v1008, %v1007
      %v1022 = vpack.c.b16 %v1010, %v1009
      %v1023 = vpack.c.b16 %v1012, %v1011
      %v1024 = vpack.c.b16 %v1014, %v1013
      %v1025 = vpack.c.b16 %v1016, %v1015
      %v1026 = vpack.c.b16 %v1018, %v1017
      %1035 = vmatprep.subr.bf16.mxu0 0
      %1036 = vmatpush1.bf16.msra.mxu0 %v1026
      %1037 = vmatprep.subr.bf16.mxu0 0
      %1038 = vmatpush1.bf16.msra.mxu0 %v1025
      %1039 = vmatprep.subr.bf16.mxu0 0
      %1040 = vmatpush1.bf16.msra.mxu0 %v1024
      %1041 = vmatprep.subr.bf16.mxu0 0
      %1042 = vmatpush1.bf16.msra.mxu0 %v1023
      %1043 = vmatprep.subr.bf16.mxu0 0
      %1044 = vmatpush1.bf16.msra.mxu0 %v1022
      %1045 = vmatprep.subr.bf16.mxu0 0
      %1046 = vmatpush1.bf16.msra.mxu0 %v1021
      %1047 = vmatprep.subr.bf16.mxu0 0
      %1048 = vmatpush1.bf16.msra.mxu0 %v1020
      %1049 = vmatprep.subr.bf16.mxu0 0
      %1050 = vmatpush1.bf16.msra.mxu0 %v1019
      %1051 = vmatprep.subr.bf16.mxu0 0
      %1052 = vmatpush2.bf16.msra.mxu0 0
      %1053 = vmatprep.subr.bf16.mxu0 0
      %1054 = vmatpush2.bf16.msra.mxu0 0
      %1055 = vmatprep.subr.bf16.mxu0 0
      %1056 = vmatpush2.bf16.msra.mxu0 0
      %1057 = vmatprep.subr.bf16.mxu0 0
      %1058 = vmatpush2.bf16.msra.mxu0 0
      %1059 = vmatprep.subr.bf16.mxu0 0
      %1060 = vmatpush2.bf16.msra.mxu0 0
      %1061 = vmatprep.subr.bf16.mxu0 0
      %1062 = vmatpush2.bf16.msra.mxu0 0
      %1063 = vmatprep.subr.bf16.mxu0 0
      %1064 = vmatpush2.bf16.msra.mxu0 0
      %1065 = vmatprep.subr.bf16.mxu0 0
      %1066 = vmatpush2.bf16.msra.mxu0 0
      %1067 = vmatprep.mubr.bf16.mxu0 0
      %1068 = vmatmul.mubr.bf16.gmra.mxu0 %v963
      %v1069 = vpop.f32.mrf.mxu0
      %v1070 = vadd.f32 %v985, %v1069
      %v1071 = vpop.f32.mrf.mxu0
      %v1072 = vpop.f32.mrf.mxu0
      %v1073 = vadd.f32 %v985, %v1072
      %v1074 = vpop.f32.mrf.mxu0
      %1075 = vdwg.mxu0
      %v1076 = vpack.c.bf16 %v1073, %v1070
      %v1077 = vld [vmem:[#allocation11] sm:$0xf]
      %v1078 = vld [vmem:[#allocation11 + $0x4] sm:$0xf]
      %v1079 = vld [vmem:[#allocation11 + $0x8] sm:$0xf]
      %v1080 = vld [vmem:[#allocation11 + $0xc] sm:$0xf]
      %v1081 = vld [vmem:[#allocation11 + $0x10] sm:$0xf]
      %v1082 = vld [vmem:[#allocation11 + $0x14] sm:$0xf]
      %v1083 = vld [vmem:[#allocation11 + $0x18] sm:$0xf]
      %v1084 = vld [vmem:[#allocation11 + $0x1c] sm:$0xf]
      %v1085 = vld [vmem:[#allocation11 + $0x20] sm:$0xf]
      %v1086 = vld [vmem:[#allocation11 + $0x24] sm:$0xf]
      %v1087 = vld [vmem:[#allocation11 + $0x28] sm:$0xf]
      %v1088 = vld [vmem:[#allocation11 + $0x2c] sm:$0xf]
      %v1089 = vld [vmem:[#allocation11 + $0x30] sm:$0xf]
      %v1090 = vld [vmem:[#allocation11 + $0x34] sm:$0xf]
      %v1091 = vld [vmem:[#allocation11 + $0x38] sm:$0xf]
      %v1092 = vld [vmem:[#allocation11 + $0x3c] sm:$0xf]
      %v1093 = vld [vmem:[%s8] sm:$0x1]
      %v1095 = vlaneseq
      %v1096 = vshrl.u32 %v1095, 7
      %v1097 = vsub.s32 0, %v1096
      %v1098 = vrot.slane %v1093, %v1097
      %v1116 = vunpack.c.l.b16 %v1077
      %v1117 = vunpack.c.l.b16 %v1078
      %v1118 = vunpack.c.l.b16 %v1079
      %v1119 = vunpack.c.l.b16 %v1080
      %v1120 = vunpack.c.l.b16 %v1081
      %v1121 = vunpack.c.l.b16 %v1082
      %v1122 = vunpack.c.l.b16 %v1083
      %v1123 = vunpack.c.l.b16 %v1084
      %v1124 = vunpack.c.l.b16 %v1085
      %v1125 = vunpack.c.l.b16 %v1086
      %v1126 = vunpack.c.l.b16 %v1087
      %v1127 = vunpack.c.l.b16 %v1088
      %v1128 = vunpack.c.l.b16 %v1089
      %v1129 = vunpack.c.l.b16 %v1090
      %v1130 = vunpack.c.l.b16 %v1091
      %v1131 = vunpack.c.l.b16 %v1092
      %v1132 = vpack.c.b16 %v1117, %v1116
      %v1133 = vpack.c.b16 %v1119, %v1118
      %v1134 = vpack.c.b16 %v1121, %v1120
      %v1135 = vpack.c.b16 %v1123, %v1122
      %v1136 = vpack.c.b16 %v1125, %v1124
      %v1137 = vpack.c.b16 %v1127, %v1126
      %v1138 = vpack.c.b16 %v1129, %v1128
      %v1139 = vpack.c.b16 %v1131, %v1130
      %1148 = vmatprep.subr.bf16.mxu0 0
      %1149 = vmatpush1.bf16.msra.mxu0 %v1139
      %1150 = vmatprep.subr.bf16.mxu0 0
      %1151 = vmatpush1.bf16.msra.mxu0 %v1138
      %1152 = vmatprep.subr.bf16.mxu0 0
      %1153 = vmatpush1.bf16.msra.mxu0 %v1137
      %1154 = vmatprep.subr.bf16.mxu0 0
      %1155 = vmatpush1.bf16.msra.mxu0 %v1136
      %1156 = vmatprep.subr.bf16.mxu0 0
      %1157 = vmatpush1.bf16.msra.mxu0 %v1135
      %1158 = vmatprep.subr.bf16.mxu0 0
      %1159 = vmatpush1.bf16.msra.mxu0 %v1134
      %1160 = vmatprep.subr.bf16.mxu0 0
      %1161 = vmatpush1.bf16.msra.mxu0 %v1133
      %1162 = vmatprep.subr.bf16.mxu0 0
      %1163 = vmatpush1.bf16.msra.mxu0 %v1132
      %1164 = vmatprep.subr.bf16.mxu0 0
      %1165 = vmatpush2.bf16.msra.mxu0 0
      %1166 = vmatprep.subr.bf16.mxu0 0
      %1167 = vmatpush2.bf16.msra.mxu0 0
      %1168 = vmatprep.subr.bf16.mxu0 0
      %1169 = vmatpush2.bf16.msra.mxu0 0
      %1170 = vmatprep.subr.bf16.mxu0 0
      %1171 = vmatpush2.bf16.msra.mxu0 0
      %1172 = vmatprep.subr.bf16.mxu0 0
      %1173 = vmatpush2.bf16.msra.mxu0 0
      %1174 = vmatprep.subr.bf16.mxu0 0
      %1175 = vmatpush2.bf16.msra.mxu0 0
      %1176 = vmatprep.subr.bf16.mxu0 0
      %1177 = vmatpush2.bf16.msra.mxu0 0
      %1178 = vmatprep.subr.bf16.mxu0 0
      %1179 = vmatpush2.bf16.msra.mxu0 0
      %1180 = vmatprep.mubr.bf16.mxu0 0
      %1181 = vmatmul.mubr.bf16.gmra.mxu0 %v1076
      %v1182 = vpop.f32.mrf.mxu0
      %v1183 = vadd.f32 %v1098, %v1182
      %v1184 = vpop.f32.mrf.mxu0
      %v1185 = vpop.f32.mrf.mxu0
      %v1186 = vadd.f32 %v1098, %v1185
      %v1187 = vpop.f32.mrf.mxu0
      %1188 = vdwg.mxu0
      %1189 = vst [vmem:[#allocation12] sm:$0xff] %v1183
      %1190 = vst [vmem:[#allocation12 + $0x8] sm:$0xff] %v1186
    $region65: #{tpu_custom_call.1} parent=1 // pred_fallthru
      _
    // Predicated region
    $region66: #{tpu_custom_call.1} parent=1 // pred_check
      _
    $region67: #{tpu_custom_call.1} parent=1 // pred_check_branch
      %1192 = sbr.rel (0) target = $region69
    $region68: #{tpu_custom_call.1} parent=1 // pred_region
      %s1194 = ssub.s32 256, 256
      %1195 = vsyncadd [#allocation5], %s1194
      %s1196 = sshll.u32 [#allocation12], 4
      %s1197 = int_to_ptr.vmem [resolvable:$true] %s1196
      %1202 = dma.vmem_to_hbm [thread:$0]  %s1197, 256, %s9, [#allocation5], 128, 128, 8
    $region69: #{tpu_custom_call.1} parent=1 // pred_fallthru
      _
    // Predicated region
    $region70: #{tpu_custom_call.1} parent=1 // pred_check
      _
    $region71: #{tpu_custom_call.1} parent=1 // pred_check_branch
      %1204 = sbr.rel (0) target = $region73
    $region72: #{tpu_custom_call.1} parent=1 // pred_region
      %1205 = dma.done [#allocation5], 256
    $region73: #{tpu_custom_call.1} parent=1 // pred_fallthru
      _
    %1206 = vsyncpa [#allocation4], 1
    %1207 = vsyncpa [#allocation7], 1
    %1208 = vsyncpa [#allocation10], 1
    %1209 = vsyncpa [#allocation5], 1

</llo_original>
